<compile_context>
chip_gen: v7x
topology: tpu7x:2x2x1
jax: 0.10.0
libtpu: 0.0.40
codegen_flags: <defaults>
</compile_context>

<pallas_src>
import functools

import jax
import jax.numpy as jnp
from jax import lax
from jax.experimental import pallas as pl
from jax.experimental.pallas import tpu as pltpu


def _round_up(x, m):
    return (x + m - 1) // m * m


def _decoder_kernel(
    xs_ref, xm_ref, xl_ref,          # inputs  (1, C, Tt) each
    ws_ref, wm_ref, wl_ref,          # weights (C, G*s) each (zero-padded taps)
    bs_ref, bm_ref, bl_ref,          # biases  (1,) in SMEM
    os_ref, om_ref, ol_ref,          # outputs (1, s, Tt) phase-major blocks
    acc_s, acc_m, acc_l,             # VMEM scratch (s, Tt + G - 1)
    car_s, car_m, car_l,             # VMEM scratch (s, G - 1)  cross-tile halo
    *, stride, tile, groups, n_real_tiles):
    oi = pl.program_id(1)            # frame/output tile index (last = flush tile)
    s = stride
    Tt = tile

    def one_stream(x_ref, w_ref, b_ref, o_ref, acc_ref, car_ref, G):
        acc_ref[...] = jnp.zeros(acc_ref.shape, acc_ref.dtype)

        @pl.when(oi < n_real_tiles)          # real input tile -> compute contrib
        def _compute():
            x = x_ref[0]                     # (C, Tt)
            w = w_ref[...]                   # (C, G*s)
            # contribT[l, t] = sum_c w[c, l] * x[c, t]  (MXU, lane axis = frames)
            ct = lax.dot_general(
                w, x, (((0,), (0,)), ((), ())),
                preferred_element_type=jnp.float32)      # (G*s, Tt)
            # overlap-add as G shifted, lane-dense slab adds (static unroll)
            for g in range(G):
                acc_ref[:, g:g + Tt] = (
                    acc_ref[:, g:g + Tt] + ct[g * s:(g + 1) * s, :])

        @pl.when(oi > 0)                     # halo carried in from previous tile
        def _carry_in():
            acc_ref[:, 0:G - 1] = acc_ref[:, 0:G - 1] + car_ref[...]

        # halo carried out to the next tile (flush tile just writes zeros)
        car_ref[...] = acc_ref[:, Tt:Tt + G - 1]
        # single lane-dense store of this output tile (written exactly once)
        o_ref[0, :, :] = (acc_ref[:, 0:Tt] + b_ref[0]).astype(o_ref.dtype)

    one_stream(xs_ref, ws_ref, bs_ref, os_ref, acc_s, car_s, groups[0])
    one_stream(xm_ref, wm_ref, bm_ref, om_ref, acc_m, car_m, groups[1])
    one_stream(xl_ref, wl_ref, bl_ref, ol_ref, acc_l, car_l, groups[2])


def speech_decoder_forward(x_short, x_middle, x_long,
                           w_short, b_short, w_middle, b_middle,
                           w_long, b_long, stride, *, frames_per_tile=512):
    """Fused SpEx+ decoder forward. Inputs (B, C, T); returns three (B, T_out_i)."""
    B, C, T = x_short.shape
    assert x_middle.shape == (B, C, T) and x_long.shape == (B, C, T)
    s = int(stride)
    assert s >= 1

    ws = [w_short, w_middle, w_long]
    bs = [b_short, b_middle, b_long]
    Ls = [int(w.shape[1]) for w in ws]

    # Pad each kernel length up to a multiple of the stride (>= 2*stride) with
    # zero taps so the overlap-add decomposes into G = L_pad // stride groups.
    groups, w_pad = [], []
    for w, L in zip(ws, Ls):
        G = max(-(-L // s), 2)
        Lp = G * s
        groups.append(G)
        w_pad.append(jnp.pad(w, ((0, 0), (0, Lp - L))) if Lp != L else w)
    groups = tuple(groups)

    # Frame tiling: frame axis is the 128-lane axis of x; pad T with zero frames
    # (zero frames contribute exactly nothing to a transposed convolution).
    Tt = min(int(frames_per_tile), _round_up(T, 128))
    Tt = _round_up(Tt, 128)
    T_padded = _round_up(T, Tt)
    NT = T_padded // Tt              # real input tiles
    NO = NT + 1                      # +1 flush tile that writes the trailing halo
    if T_padded != T:
        pad = ((0, 0), (0, 0), (0, T_padded - T))
        x_short = jnp.pad(x_short, pad)
        x_middle = jnp.pad(x_middle, pad)
        x_long = jnp.pad(x_long, pad)
    for G in groups:
        assert G - 1 <= Tt, "kernel length too large for the chosen frame tile"

    kernel = functools.partial(
        _decoder_kernel, stride=s, tile=Tt, groups=groups, n_real_tiles=NT)

    x_spec = pl.BlockSpec(
        (1, C, Tt), lambda b, oi: (b, 0, jnp.minimum(oi, NT - 1)))

    def w_spec(Lp):
        return pl.BlockSpec((C, Lp), lambda b, oi: (0, 0))

    b_spec = pl.BlockSpec(memory_space=pltpu.MemorySpace.SMEM)
    o_spec = pl.BlockSpec((1, s, Tt), lambda b, oi: (b, 0, oi))

    out_shape = tuple(
        jax.ShapeDtypeStruct((B, s, NO * Tt), jnp.float32) for _ in range(3))
    scratch_shapes = (
        [pltpu.VMEM((s, Tt + G - 1), jnp.float32) for G in groups]
        + [pltpu.VMEM((s, G - 1), jnp.float32) for G in groups])

    flops = sum(2 * B * C * (G * s) * T_padded for G in groups)
    bytes_accessed = 4 * (3 * B * C * T_padded
                          + 3 * B * s * NO * Tt
                          + sum(C * G * s for G in groups))
    cost = pl.CostEstimate(flops=flops, transcendentals=0,
                           bytes_accessed=bytes_accessed)

    ph_s, ph_m, ph_l = pl.pallas_call(
        kernel,
        out_shape=out_shape,
        grid=(B, NO),
        in_specs=[x_spec, x_spec, x_spec,
                  w_spec(groups[0] * s), w_spec(groups[1] * s),
                  w_spec(groups[2] * s),
                  b_spec, b_spec, b_spec],
        out_specs=(o_spec, o_spec, o_spec),
        scratch_shapes=scratch_shapes,
        compiler_params=pltpu.CompilerParams(
            dimension_semantics=("parallel", "arbitrary"),
            vmem_limit_bytes=32 * 1024 * 1024),
        cost_estimate=cost,
    )(x_short, x_middle, x_long,
      w_pad[0], w_pad[1], w_pad[2],
      bs[0], bs[1], bs[2])

    def phase_to_time(ph, L):
        # ph[b, r, k] == out[b, k*stride + r]  (wrapper-side layout plumbing)
        T_out = (T - 1) * s + L
        y = jnp.transpose(ph, (0, 2, 1)).reshape(B, -1)
        return y[:, :T_out]

    return (phase_to_time(ph_s, Ls[0]),
            phase_to_time(ph_m, Ls[1]),
            phase_to_time(ph_l, Ls[2]))


class SpeechDecoderPallas:
    """JAX/Pallas port of SpeechDecoder(L1, L2, L3, channels_cnt)."""

    def __init__(self, L1, L2, L3, channels_cnt, key):
        self.stride = L1 // 2
        ks = jax.random.split(key, 6)

        def init(kw, kb, L):
            bound = 1.0 / (channels_cnt * L) ** 0.5
            w = jax.random.uniform(kw, (channels_cnt, L), jnp.float32, -bound, bound)
            b = jax.random.uniform(kb, (1,), jnp.float32, -bound, bound)
            return w, b

        self.w_short, self.b_short = init(ks[0], ks[1], L1)
        self.w_middle, self.b_middle = init(ks[2], ks[3], L2)
        self.w_long, self.b_long = init(ks[4], ks[5], L3)

    def __call__(self, x_short, x_middle, x_long, *, frames_per_tile=512):
        # squeeze(1) of the PyTorch module is implicit: out_channels=1 is never
        # materialized, the kernel produces (B, T_out) directly.
        # TODO(synk): optionally cast x/w to bfloat16 on v6e/v7x to halve the
        # HBM read stream (accumulation already happens in f32 on the MXU).
        return speech_decoder_forward(
            x_short, x_middle, x_long,
            self.w_short, self.b_short,
            self.w_middle, self.b_middle,
            self.w_long, self.b_long,
            self.stride, frames_per_tile=frames_per_tile)


def _reference_conv_transpose1d(x, w, b, stride):
    """Pure-JAX reference (same math as torch ConvTranspose1d, out_ch=1)."""
    B, C, T = x.shape
    L = w.shape[1]
    T_out = (T - 1) * stride + L
    # zero-upsample along time, then correlate with the flipped kernel
    x_up = jnp.zeros((B, C, (T - 1) * stride + 1), x.dtype)
    x_up = x_up.at[:, :, ::stride].set(x)
    x_pad = jnp.pad(x_up, ((0, 0), (0, 0), (L - 1, L - 1)))
    w_flip = w[:, ::-1]
    windows = jnp.stack([x_pad[:, :, k:k + T_out] for k in range(L)], axis=-1)
    return jnp.einsum("bcnk,ck->bn", windows, w_flip) + b[0]


if __name__ == "__main__":
    L1, L2, L3 = 8, 16, 32
    channels_cnt = 16
    B, T = 2, 300                     # T not a multiple of 128 -> exercises padding
    stride = L1 // 2

    key = jax.random.PRNGKey(0)
    k_params, k_s, k_m, k_l = jax.random.split(key, 4)
    decoder = SpeechDecoderPallas(L1, L2, L3, channels_cnt, k_params)

    x_short = jax.random.normal(k_s, (B, channels_cnt, T), jnp.float32)
    x_middle = jax.random.normal(k_m, (B, channels_cnt, T), jnp.float32)
    x_long = jax.random.normal(k_l, (B, channels_cnt, T), jnp.float32)

    # Multi-tile path: 128-frame tiles -> 3 real tiles (+1 flush) per batch.
    y_s, y_m, y_l = decoder(x_short, x_middle, x_long, frames_per_tile=128)
    jax.block_until_ready((y_s, y_m, y_l))

    r_s = _reference_conv_transpose1d(x_short, decoder.w_short, decoder.b_short, stride)
    r_m = _reference_conv_transpose1d(x_middle, decoder.w_middle, decoder.b_middle, stride)
    r_l = _reference_conv_transpose1d(x_long, decoder.w_long, decoder.b_long, stride)

    assert y_s.shape == (B, (T - 1) * stride + L1)
    assert y_m.shape == (B, (T - 1) * stride + L2)
    assert y_l.shape == (B, (T - 1) * stride + L3)
    assert jnp.allclose(y_s, r_s, atol=1e-4, rtol=1e-4)
    assert jnp.allclose(y_m, r_m, atol=1e-4, rtol=1e-4)
    assert jnp.allclose(y_l, r_l, atol=1e-4, rtol=1e-4)

    # Single-tile path (tiny T, exercises the zero-frame padding to one tile).
    Ts = 8
    xs2, xm2, xl2 = x_short[:, :, :Ts], x_middle[:, :, :Ts], x_long[:, :, :Ts]
    y2 = decoder(xs2, xm2, xl2)
    jax.block_until_ready(y2)
    r2 = (_reference_conv_transpose1d(xs2, decoder.w_short, decoder.b_short, stride),
          _reference_conv_transpose1d(xm2, decoder.w_middle, decoder.b_middle, stride),
          _reference_conv_transpose1d(xl2, decoder.w_long, decoder.b_long, stride))
    for got, want in zip(y2, r2):
        assert got.shape == want.shape
        assert jnp.allclose(got, want, atol=1e-4, rtol=1e-4)

    print("KERNEL_OK")
</pallas_src>

<mosaic_0001>
module attributes {stable_mosaic.version = 11 : i64} {
  func.func @_decoder_kernel(%arg0: i32, %arg1: i32, %arg2: memref<1x16x128xf32, #tpu.memory_space<vmem>>, %arg3: memref<1x16x128xf32, #tpu.memory_space<vmem>>, %arg4: memref<1x16x128xf32, #tpu.memory_space<vmem>>, %arg5: memref<16x8xf32, #tpu.memory_space<vmem>>, %arg6: memref<16x16xf32, #tpu.memory_space<vmem>>, %arg7: memref<16x32xf32, #tpu.memory_space<vmem>>, %arg8: memref<1xf32, #tpu.memory_space<smem>>, %arg9: memref<1xf32, #tpu.memory_space<smem>>, %arg10: memref<1xf32, #tpu.memory_space<smem>>, %arg11: memref<1x4x128xf32, #tpu.memory_space<vmem>>, %arg12: memref<1x4x128xf32, #tpu.memory_space<vmem>>, %arg13: memref<1x4x128xf32, #tpu.memory_space<vmem>>, %arg14: memref<4x129xf32, #tpu.memory_space<vmem>>, %arg15: memref<4x131xf32, #tpu.memory_space<vmem>>, %arg16: memref<4x135xf32, #tpu.memory_space<vmem>>, %arg17: memref<4x1xf32, #tpu.memory_space<vmem>>, %arg18: memref<4x3xf32, #tpu.memory_space<vmem>>, %arg19: memref<4x7xf32, #tpu.memory_space<vmem>>) attributes {dimension_semantics = [#tpu.dimension_semantics<parallel>, #tpu.dimension_semantics<arbitrary>], iteration_bounds = array<i64: 2, 4>, scalar_prefetch = 0 : i64, scratch_operands = 6 : i64, tpu.core_type = #tpu.core_type<tc>, window_params = [{transform_indices = @transform_0, window_bounds = array<i64: 1, 16, 128>}, {transform_indices = @transform_1, window_bounds = array<i64: 1, 16, 128>}, {transform_indices = @transform_2, window_bounds = array<i64: 1, 16, 128>}, {pipeline_mode = #tpu.pipeline_mode<synchronous>, transform_indices = @transform_3, window_bounds = array<i64: 16, 8>}, {pipeline_mode = #tpu.pipeline_mode<synchronous>, transform_indices = @transform_4, window_bounds = array<i64: 16, 16>}, {pipeline_mode = #tpu.pipeline_mode<synchronous>, transform_indices = @transform_5, window_bounds = array<i64: 16, 32>}, {transform_indices = @transform_6, window_bounds = array<i64: 1>}, {transform_indices = @transform_7, window_bounds = array<i64: 1>}, {transform_indices = @transform_8, window_bounds = array<i64: 1>}, {transform_indices = @transform_9, window_bounds = array<i64: 1, 4, 128>}, {transform_indices = @transform_10, window_bounds = array<i64: 1, 4, 128>}, {transform_indices = @transform_11, window_bounds = array<i64: 1, 4, 128>}]} {
    %cst = arith.constant 0.000000e+00 : f32
    %0 = vector.broadcast %cst : f32 to vector<4x129xf32>
    %c0 = arith.constant 0 : index
    %c0_0 = arith.constant 0 : index
    %1 = vector.load %arg14[%c0, %c0_0] : memref<4x129xf32, #tpu.memory_space<vmem>>, vector<4x129xf32>
    tpu.vector_store %arg14[%c0, %c0_0], %0 {strides = array<i32>} : memref<4x129xf32, #tpu.memory_space<vmem>>, vector<4x129xf32>,
    %c3_i32 = arith.constant 3 : i32
    %2 = arith.cmpi slt, %arg1, %c3_i32 : i32
    %3 = arith.extui %2 : i1 to i32
    %c0_i32 = arith.constant 0 : i32
    %4 = arith.cmpi ne, %3, %c0_i32 : i32
    scf.if %4 {
      %c0_46 = arith.constant 0 : index
      %c0_47 = arith.constant 0 : index
      %c0_48 = arith.constant 0 : index
      %51 = vector.load %arg2[%c0_46, %c0_47, %c0_48] : memref<1x16x128xf32, #tpu.memory_space<vmem>>, vector<1x16x128xf32>
      %52 = vector.shape_cast %51 : vector<1x16x128xf32> to vector<16x128xf32>
      %c0_49 = arith.constant 0 : index
      %c0_50 = arith.constant 0 : index
      %53 = vector.load %arg5[%c0_49, %c0_50] : memref<16x8xf32, #tpu.memory_space<vmem>>, vector<16x8xf32>
      %cst_51 = arith.constant dense<0.000000e+00> : vector<8x128xf32>
      %54 = tpu.matmul %53, %52, %cst_51 {dimension_numbers = #tpu.dot_dimension_numbers<[0], [0], [1], [1], [0, 1, 1, 1], [], []>} : vector<16x8xf32>, vector<16x128xf32>, vector<8x128xf32> -> vector<8x128xf32>
      %c0_52 = arith.constant 0 : index
      %c0_53 = arith.constant 0 : index
      %55 = vector.load %arg14[%c0_52, %c0_53] : memref<4x129xf32, #tpu.memory_space<vmem>>, vector<4x128xf32>
      %56 = vector.extract_strided_slice %54 {offsets = [0, 0], sizes = [4, 128], strides = [1, 1]} : vector<8x128xf32> to vector<4x128xf32>
      %57 = arith.addf %55, %56 : vector<4x128xf32>
      %c0_54 = arith.constant 0 : index
      %c0_55 = arith.constant 0 : index
      %58 = vector.load %arg14[%c0_54, %c0_55] : memref<4x129xf32, #tpu.memory_space<vmem>>, vector<4x128xf32>
      tpu.vector_store %arg14[%c0_54, %c0_55], %57 {strides = array<i32>} : memref<4x129xf32, #tpu.memory_space<vmem>>, vector<4x128xf32>,
      %c0_56 = arith.constant 0 : index
      %c1 = arith.constant 1 : index
      %59 = vector.load %arg14[%c0_56, %c1] : memref<4x129xf32, #tpu.memory_space<vmem>>, vector<4x128xf32>
      %60 = vector.extract_strided_slice %54 {offsets = [4, 0], sizes = [4, 128], strides = [1, 1]} : vector<8x128xf32> to vector<4x128xf32>
      %61 = arith.addf %59, %60 : vector<4x128xf32>
      %c0_57 = arith.constant 0 : index
      %c1_58 = arith.constant 1 : index
      %62 = vector.load %arg14[%c0_57, %c1_58] : memref<4x129xf32, #tpu.memory_space<vmem>>, vector<4x128xf32>
      tpu.vector_store %arg14[%c0_57, %c1_58], %61 {strides = array<i32>} : memref<4x129xf32, #tpu.memory_space<vmem>>, vector<4x128xf32>,
    } else {
    }
    %c0_i32_1 = arith.constant 0 : i32
    %5 = arith.cmpi sgt, %arg1, %c0_i32_1 : i32
    %6 = arith.extui %5 : i1 to i32
    %c0_i32_2 = arith.constant 0 : i32
    %7 = arith.cmpi ne, %6, %c0_i32_2 : i32
    scf.if %7 {
      %c0_46 = arith.constant 0 : index
      %c0_47 = arith.constant 0 : index
      %51 = vector.load %arg14[%c0_46, %c0_47] : memref<4x129xf32, #tpu.memory_space<vmem>>, vector<4x1xf32>
      %c0_48 = arith.constant 0 : index
      %c0_49 = arith.constant 0 : index
      %52 = vector.load %arg17[%c0_48, %c0_49] : memref<4x1xf32, #tpu.memory_space<vmem>>, vector<4x1xf32>
      %53 = arith.addf %51, %52 : vector<4x1xf32>
      %c0_50 = arith.constant 0 : index
      %c0_51 = arith.constant 0 : index
      %54 = vector.load %arg14[%c0_50, %c0_51] : memref<4x129xf32, #tpu.memory_space<vmem>>, vector<4x1xf32>
      tpu.vector_store %arg14[%c0_50, %c0_51], %53 {strides = array<i32>} : memref<4x129xf32, #tpu.memory_space<vmem>>, vector<4x1xf32>,
    } else {
    }
    %c0_3 = arith.constant 0 : index
    %c128 = arith.constant 128 : index
    %8 = vector.load %arg14[%c0_3, %c128] : memref<4x129xf32, #tpu.memory_space<vmem>>, vector<4x1xf32>
    %c0_4 = arith.constant 0 : index
    %c0_5 = arith.constant 0 : index
    %9 = vector.load %arg17[%c0_4, %c0_5] : memref<4x1xf32, #tpu.memory_space<vmem>>, vector<4x1xf32>
    tpu.vector_store %arg17[%c0_4, %c0_5], %8 {strides = array<i32>} : memref<4x1xf32, #tpu.memory_space<vmem>>, vector<4x1xf32>,
    %c0_6 = arith.constant 0 : index
    %c0_7 = arith.constant 0 : index
    %10 = vector.load %arg14[%c0_6, %c0_7] : memref<4x129xf32, #tpu.memory_space<vmem>>, vector<4x128xf32>
    %c0_8 = arith.constant 0 : index
    %11 = memref.load %arg8[%c0_8] : memref<1xf32, #tpu.memory_space<smem>>
    %12 = vector.broadcast %11 : f32 to vector<4x128xf32>
    %13 = arith.addf %10, %12 : vector<4x128xf32>
    %c0_9 = arith.constant 0 : index
    %c0_10 = arith.constant 0 : index
    %c0_11 = arith.constant 0 : index
    %14 = vector.load %arg11[%c0_9, %c0_10, %c0_11] : memref<1x4x128xf32, #tpu.memory_space<vmem>>, vector<1x4x128xf32>
    %15 = vector.shape_cast %14 : vector<1x4x128xf32> to vector<4x128xf32>
    %16 = vector.shape_cast %13 : vector<4x128xf32> to vector<1x4x128xf32>
    tpu.vector_store %arg11[%c0_9, %c0_10, %c0_11], %16 {strides = array<i32>} : memref<1x4x128xf32, #tpu.memory_space<vmem>>, vector<1x4x128xf32>,
    %cst_12 = arith.constant 0.000000e+00 : f32
    %17 = vector.broadcast %cst_12 : f32 to vector<4x131xf32>
    %c0_13 = arith.constant 0 : index
    %c0_14 = arith.constant 0 : index
    %18 = vector.load %arg15[%c0_13, %c0_14] : memref<4x131xf32, #tpu.memory_space<vmem>>, vector<4x131xf32>
    tpu.vector_store %arg15[%c0_13, %c0_14], %17 {strides = array<i32>} : memref<4x131xf32, #tpu.memory_space<vmem>>, vector<4x131xf32>,
    %c3_i32_15 = arith.constant 3 : i32
    %19 = arith.cmpi slt, %arg1, %c3_i32_15 : i32
    %20 = arith.extui %19 : i1 to i32
    %c0_i32_16 = arith.constant 0 : i32
    %21 = arith.cmpi ne, %20, %c0_i32_16 : i32
    scf.if %21 {
      %c0_46 = arith.constant 0 : index
      %c0_47 = arith.constant 0 : index
      %c0_48 = arith.constant 0 : index
      %51 = vector.load %arg3[%c0_46, %c0_47, %c0_48] : memref<1x16x128xf32, #tpu.memory_space<vmem>>, vector<1x16x128xf32>
      %52 = vector.shape_cast %51 : vector<1x16x128xf32> to vector<16x128xf32>
      %c0_49 = arith.constant 0 : index
      %c0_50 = arith.constant 0 : index
      %53 = vector.load %arg6[%c0_49, %c0_50] : memref<16x16xf32, #tpu.memory_space<vmem>>, vector<16x16xf32>
      %cst_51 = arith.constant dense<0.000000e+00> : vector<16x128xf32>
      %54 = tpu.matmul %53, %52, %cst_51 {dimension_numbers = #tpu.dot_dimension_numbers<[0], [0], [1], [1], [0, 1, 1, 1], [], []>} : vector<16x16xf32>, vector<16x128xf32>, vector<16x128xf32> -> vector<16x128xf32>
      %c0_52 = arith.constant 0 : index
      %c0_53 = arith.constant 0 : index
      %55 = vector.load %arg15[%c0_52, %c0_53] : memref<4x131xf32, #tpu.memory_space<vmem>>, vector<4x128xf32>
      %56 = vector.extract_strided_slice %54 {offsets = [0, 0], sizes = [4, 128], strides = [1, 1]} : vector<16x128xf32> to vector<4x128xf32>
      %57 = arith.addf %55, %56 : vector<4x128xf32>
      %c0_54 = arith.constant 0 : index
      %c0_55 = arith.constant 0 : index
      %58 = vector.load %arg15[%c0_54, %c0_55] : memref<4x131xf32, #tpu.memory_space<vmem>>, vector<4x128xf32>
      tpu.vector_store %arg15[%c0_54, %c0_55], %57 {strides = array<i32>} : memref<4x131xf32, #tpu.memory_space<vmem>>, vector<4x128xf32>,
      %c0_56 = arith.constant 0 : index
      %c1 = arith.constant 1 : index
      %59 = vector.load %arg15[%c0_56, %c1] : memref<4x131xf32, #tpu.memory_space<vmem>>, vector<4x128xf32>
      %60 = vector.extract_strided_slice %54 {offsets = [4, 0], sizes = [4, 128], strides = [1, 1]} : vector<16x128xf32> to vector<4x128xf32>
      %61 = arith.addf %59, %60 : vector<4x128xf32>
      %c0_57 = arith.constant 0 : index
      %c1_58 = arith.constant 1 : index
      %62 = vector.load %arg15[%c0_57, %c1_58] : memref<4x131xf32, #tpu.memory_space<vmem>>, vector<4x128xf32>
      tpu.vector_store %arg15[%c0_57, %c1_58], %61 {strides = array<i32>} : memref<4x131xf32, #tpu.memory_space<vmem>>, vector<4x128xf32>,
      %c0_59 = arith.constant 0 : index
      %c2 = arith.constant 2 : index
      %63 = vector.load %arg15[%c0_59, %c2] : memref<4x131xf32, #tpu.memory_space<vmem>>, vector<4x128xf32>
      %64 = vector.extract_strided_slice %54 {offsets = [8, 0], sizes = [4, 128], strides = [1, 1]} : vector<16x128xf32> to vector<4x128xf32>
      %65 = arith.addf %63, %64 : vector<4x128xf32>
      %c0_60 = arith.constant 0 : index
      %c2_61 = arith.constant 2 : index
      %66 = vector.load %arg15[%c0_60, %c2_61] : memref<4x131xf32, #tpu.memory_space<vmem>>, vector<4x128xf32>
      tpu.vector_store %arg15[%c0_60, %c2_61], %65 {strides = array<i32>} : memref<4x131xf32, #tpu.memory_space<vmem>>, vector<4x128xf32>,
      %c0_62 = arith.constant 0 : index
      %c3 = arith.constant 3 : index
      %67 = vector.load %arg15[%c0_62, %c3] : memref<4x131xf32, #tpu.memory_space<vmem>>, vector<4x128xf32>
      %68 = vector.extract_strided_slice %54 {offsets = [12, 0], sizes = [4, 128], strides = [1, 1]} : vector<16x128xf32> to vector<4x128xf32>
      %69 = arith.addf %67, %68 : vector<4x128xf32>
      %c0_63 = arith.constant 0 : index
      %c3_64 = arith.constant 3 : index
      %70 = vector.load %arg15[%c0_63, %c3_64] : memref<4x131xf32, #tpu.memory_space<vmem>>, vector<4x128xf32>
      tpu.vector_store %arg15[%c0_63, %c3_64], %69 {strides = array<i32>} : memref<4x131xf32, #tpu.memory_space<vmem>>, vector<4x128xf32>,
    } else {
    }
    %c0_i32_17 = arith.constant 0 : i32
    %22 = arith.cmpi sgt, %arg1, %c0_i32_17 : i32
    %23 = arith.extui %22 : i1 to i32
    %c0_i32_18 = arith.constant 0 : i32
    %24 = arith.cmpi ne, %23, %c0_i32_18 : i32
    scf.if %24 {
      %c0_46 = arith.constant 0 : index
      %c0_47 = arith.constant 0 : index
      %51 = vector.load %arg15[%c0_46, %c0_47] : memref<4x131xf32, #tpu.memory_space<vmem>>, vector<4x3xf32>
      %c0_48 = arith.constant 0 : index
      %c0_49 = arith.constant 0 : index
      %52 = vector.load %arg18[%c0_48, %c0_49] : memref<4x3xf32, #tpu.memory_space<vmem>>, vector<4x3xf32>
      %53 = arith.addf %51, %52 : vector<4x3xf32>
      %c0_50 = arith.constant 0 : index
      %c0_51 = arith.constant 0 : index
      %54 = vector.load %arg15[%c0_50, %c0_51] : memref<4x131xf32, #tpu.memory_space<vmem>>, vector<4x3xf32>
      tpu.vector_store %arg15[%c0_50, %c0_51], %53 {strides = array<i32>} : memref<4x131xf32, #tpu.memory_space<vmem>>, vector<4x3xf32>,
    } else {
    }
    %c0_19 = arith.constant 0 : index
    %c128_20 = arith.constant 128 : index
    %25 = vector.load %arg15[%c0_19, %c128_20] : memref<4x131xf32, #tpu.memory_space<vmem>>, vector<4x3xf32>
    %c0_21 = arith.constant 0 : index
    %c0_22 = arith.constant 0 : index
    %26 = vector.load %arg18[%c0_21, %c0_22] : memref<4x3xf32, #tpu.memory_space<vmem>>, vector<4x3xf32>
    tpu.vector_store %arg18[%c0_21, %c0_22], %25 {strides = array<i32>} : memref<4x3xf32, #tpu.memory_space<vmem>>, vector<4x3xf32>,
    %c0_23 = arith.constant 0 : index
    %c0_24 = arith.constant 0 : index
    %27 = vector.load %arg15[%c0_23, %c0_24] : memref<4x131xf32, #tpu.memory_space<vmem>>, vector<4x128xf32>
    %c0_25 = arith.constant 0 : index
    %28 = memref.load %arg9[%c0_25] : memref<1xf32, #tpu.memory_space<smem>>
    %29 = vector.broadcast %28 : f32 to vector<4x128xf32>
    %30 = arith.addf %27, %29 : vector<4x128xf32>
    %c0_26 = arith.constant 0 : index
    %c0_27 = arith.constant 0 : index
    %c0_28 = arith.constant 0 : index
    %31 = vector.load %arg12[%c0_26, %c0_27, %c0_28] : memref<1x4x128xf32, #tpu.memory_space<vmem>>, vector<1x4x128xf32>
    %32 = vector.shape_cast %31 : vector<1x4x128xf32> to vector<4x128xf32>
    %33 = vector.shape_cast %30 : vector<4x128xf32> to vector<1x4x128xf32>
    tpu.vector_store %arg12[%c0_26, %c0_27, %c0_28], %33 {strides = array<i32>} : memref<1x4x128xf32, #tpu.memory_space<vmem>>, vector<1x4x128xf32>,
    %cst_29 = arith.constant 0.000000e+00 : f32
    %34 = vector.broadcast %cst_29 : f32 to vector<4x135xf32>
    %c0_30 = arith.constant 0 : index
    %c0_31 = arith.constant 0 : index
    %35 = vector.load %arg16[%c0_30, %c0_31] : memref<4x135xf32, #tpu.memory_space<vmem>>, vector<4x135xf32>
    tpu.vector_store %arg16[%c0_30, %c0_31], %34 {strides = array<i32>} : memref<4x135xf32, #tpu.memory_space<vmem>>, vector<4x135xf32>,
    %c3_i32_32 = arith.constant 3 : i32
    %36 = arith.cmpi slt, %arg1, %c3_i32_32 : i32
    %37 = arith.extui %36 : i1 to i32
    %c0_i32_33 = arith.constant 0 : i32
    %38 = arith.cmpi ne, %37, %c0_i32_33 : i32
    scf.if %38 {
      %c0_46 = arith.constant 0 : index
      %c0_47 = arith.constant 0 : index
      %c0_48 = arith.constant 0 : index
      %51 = vector.load %arg4[%c0_46, %c0_47, %c0_48] : memref<1x16x128xf32, #tpu.memory_space<vmem>>, vector<1x16x128xf32>
      %52 = vector.shape_cast %51 : vector<1x16x128xf32> to vector<16x128xf32>
      %c0_49 = arith.constant 0 : index
      %c0_50 = arith.constant 0 : index
      %53 = vector.load %arg7[%c0_49, %c0_50] : memref<16x32xf32, #tpu.memory_space<vmem>>, vector<16x32xf32>
      %cst_51 = arith.constant dense<0.000000e+00> : vector<32x128xf32>
      %54 = tpu.matmul %53, %52, %cst_51 {dimension_numbers = #tpu.dot_dimension_numbers<[0], [0], [1], [1], [0, 1, 1, 1], [], []>} : vector<16x32xf32>, vector<16x128xf32>, vector<32x128xf32> -> vector<32x128xf32>
      %c0_52 = arith.constant 0 : index
      %c0_53 = arith.constant 0 : index
      %55 = vector.load %arg16[%c0_52, %c0_53] : memref<4x135xf32, #tpu.memory_space<vmem>>, vector<4x128xf32>
      %56 = vector.extract_strided_slice %54 {offsets = [0, 0], sizes = [4, 128], strides = [1, 1]} : vector<32x128xf32> to vector<4x128xf32>
      %57 = arith.addf %55, %56 : vector<4x128xf32>
      %c0_54 = arith.constant 0 : index
      %c0_55 = arith.constant 0 : index
      %58 = vector.load %arg16[%c0_54, %c0_55] : memref<4x135xf32, #tpu.memory_space<vmem>>, vector<4x128xf32>
      tpu.vector_store %arg16[%c0_54, %c0_55], %57 {strides = array<i32>} : memref<4x135xf32, #tpu.memory_space<vmem>>, vector<4x128xf32>,
      %c0_56 = arith.constant 0 : index
      %c1 = arith.constant 1 : index
      %59 = vector.load %arg16[%c0_56, %c1] : memref<4x135xf32, #tpu.memory_space<vmem>>, vector<4x128xf32>
      %60 = vector.extract_strided_slice %54 {offsets = [4, 0], sizes = [4, 128], strides = [1, 1]} : vector<32x128xf32> to vector<4x128xf32>
      %61 = arith.addf %59, %60 : vector<4x128xf32>
      %c0_57 = arith.constant 0 : index
      %c1_58 = arith.constant 1 : index
      %62 = vector.load %arg16[%c0_57, %c1_58] : memref<4x135xf32, #tpu.memory_space<vmem>>, vector<4x128xf32>
      tpu.vector_store %arg16[%c0_57, %c1_58], %61 {strides = array<i32>} : memref<4x135xf32, #tpu.memory_space<vmem>>, vector<4x128xf32>,
      %c0_59 = arith.constant 0 : index
      %c2 = arith.constant 2 : index
      %63 = vector.load %arg16[%c0_59, %c2] : memref<4x135xf32, #tpu.memory_space<vmem>>, vector<4x128xf32>
      %64 = vector.extract_strided_slice %54 {offsets = [8, 0], sizes = [4, 128], strides = [1, 1]} : vector<32x128xf32> to vector<4x128xf32>
      %65 = arith.addf %63, %64 : vector<4x128xf32>
      %c0_60 = arith.constant 0 : index
      %c2_61 = arith.constant 2 : index
      %66 = vector.load %arg16[%c0_60, %c2_61] : memref<4x135xf32, #tpu.memory_space<vmem>>, vector<4x128xf32>
      tpu.vector_store %arg16[%c0_60, %c2_61], %65 {strides = array<i32>} : memref<4x135xf32, #tpu.memory_space<vmem>>, vector<4x128xf32>,
      %c0_62 = arith.constant 0 : index
      %c3 = arith.constant 3 : index
      %67 = vector.load %arg16[%c0_62, %c3] : memref<4x135xf32, #tpu.memory_space<vmem>>, vector<4x128xf32>
      %68 = vector.extract_strided_slice %54 {offsets = [12, 0], sizes = [4, 128], strides = [1, 1]} : vector<32x128xf32> to vector<4x128xf32>
      %69 = arith.addf %67, %68 : vector<4x128xf32>
      %c0_63 = arith.constant 0 : index
      %c3_64 = arith.constant 3 : index
      %70 = vector.load %arg16[%c0_63, %c3_64] : memref<4x135xf32, #tpu.memory_space<vmem>>, vector<4x128xf32>
      tpu.vector_store %arg16[%c0_63, %c3_64], %69 {strides = array<i32>} : memref<4x135xf32, #tpu.memory_space<vmem>>, vector<4x128xf32>,
      %c0_65 = arith.constant 0 : index
      %c4 = arith.constant 4 : index
      %71 = vector.load %arg16[%c0_65, %c4] : memref<4x135xf32, #tpu.memory_space<vmem>>, vector<4x128xf32>
      %72 = vector.extract_strided_slice %54 {offsets = [16, 0], sizes = [4, 128], strides = [1, 1]} : vector<32x128xf32> to vector<4x128xf32>
      %73 = arith.addf %71, %72 : vector<4x128xf32>
      %c0_66 = arith.constant 0 : index
      %c4_67 = arith.constant 4 : index
      %74 = vector.load %arg16[%c0_66, %c4_67] : memref<4x135xf32, #tpu.memory_space<vmem>>, vector<4x128xf32>
      tpu.vector_store %arg16[%c0_66, %c4_67], %73 {strides = array<i32>} : memref<4x135xf32, #tpu.memory_space<vmem>>, vector<4x128xf32>,
      %c0_68 = arith.constant 0 : index
      %c5 = arith.constant 5 : index
      %75 = vector.load %arg16[%c0_68, %c5] : memref<4x135xf32, #tpu.memory_space<vmem>>, vector<4x128xf32>
      %76 = vector.extract_strided_slice %54 {offsets = [20, 0], sizes = [4, 128], strides = [1, 1]} : vector<32x128xf32> to vector<4x128xf32>
      %77 = arith.addf %75, %76 : vector<4x128xf32>
      %c0_69 = arith.constant 0 : index
      %c5_70 = arith.constant 5 : index
      %78 = vector.load %arg16[%c0_69, %c5_70] : memref<4x135xf32, #tpu.memory_space<vmem>>, vector<4x128xf32>
      tpu.vector_store %arg16[%c0_69, %c5_70], %77 {strides = array<i32>} : memref<4x135xf32, #tpu.memory_space<vmem>>, vector<4x128xf32>,
      %c0_71 = arith.constant 0 : index
      %c6 = arith.constant 6 : index
      %79 = vector.load %arg16[%c0_71, %c6] : memref<4x135xf32, #tpu.memory_space<vmem>>, vector<4x128xf32>
      %80 = vector.extract_strided_slice %54 {offsets = [24, 0], sizes = [4, 128], strides = [1, 1]} : vector<32x128xf32> to vector<4x128xf32>
      %81 = arith.addf %79, %80 : vector<4x128xf32>
      %c0_72 = arith.constant 0 : index
      %c6_73 = arith.constant 6 : index
      %82 = vector.load %arg16[%c0_72, %c6_73] : memref<4x135xf32, #tpu.memory_space<vmem>>, vector<4x128xf32>
      tpu.vector_store %arg16[%c0_72, %c6_73], %81 {strides = array<i32>} : memref<4x135xf32, #tpu.memory_space<vmem>>, vector<4x128xf32>,
      %c0_74 = arith.constant 0 : index
      %c7 = arith.constant 7 : index
      %83 = vector.load %arg16[%c0_74, %c7] : memref<4x135xf32, #tpu.memory_space<vmem>>, vector<4x128xf32>
      %84 = vector.extract_strided_slice %54 {offsets = [28, 0], sizes = [4, 128], strides = [1, 1]} : vector<32x128xf32> to vector<4x128xf32>
      %85 = arith.addf %83, %84 : vector<4x128xf32>
      %c0_75 = arith.constant 0 : index
      %c7_76 = arith.constant 7 : index
      %86 = vector.load %arg16[%c0_75, %c7_76] : memref<4x135xf32, #tpu.memory_space<vmem>>, vector<4x128xf32>
      tpu.vector_store %arg16[%c0_75, %c7_76], %85 {strides = array<i32>} : memref<4x135xf32, #tpu.memory_space<vmem>>, vector<4x128xf32>,
    } else {
    }
    %c0_i32_34 = arith.constant 0 : i32
    %39 = arith.cmpi sgt, %arg1, %c0_i32_34 : i32
    %40 = arith.extui %39 : i1 to i32
    %c0_i32_35 = arith.constant 0 : i32
    %41 = arith.cmpi ne, %40, %c0_i32_35 : i32
    scf.if %41 {
      %c0_46 = arith.constant 0 : index
      %c0_47 = arith.constant 0 : index
      %51 = vector.load %arg16[%c0_46, %c0_47] : memref<4x135xf32, #tpu.memory_space<vmem>>, vector<4x7xf32>
      %c0_48 = arith.constant 0 : index
      %c0_49 = arith.constant 0 : index
      %52 = vector.load %arg19[%c0_48, %c0_49] : memref<4x7xf32, #tpu.memory_space<vmem>>, vector<4x7xf32>
      %53 = arith.addf %51, %52 : vector<4x7xf32>
      %c0_50 = arith.constant 0 : index
      %c0_51 = arith.constant 0 : index
      %54 = vector.load %arg16[%c0_50, %c0_51] : memref<4x135xf32, #tpu.memory_space<vmem>>, vector<4x7xf32>
      tpu.vector_store %arg16[%c0_50, %c0_51], %53 {strides = array<i32>} : memref<4x135xf32, #tpu.memory_space<vmem>>, vector<4x7xf32>,
    } else {
    }
    %c0_36 = arith.constant 0 : index
    %c128_37 = arith.constant 128 : index
    %42 = vector.load %arg16[%c0_36, %c128_37] : memref<4x135xf32, #tpu.memory_space<vmem>>, vector<4x7xf32>
    %c0_38 = arith.constant 0 : index
    %c0_39 = arith.constant 0 : index
    %43 = vector.load %arg19[%c0_38, %c0_39] : memref<4x7xf32, #tpu.memory_space<vmem>>, vector<4x7xf32>
    tpu.vector_store %arg19[%c0_38, %c0_39], %42 {strides = array<i32>} : memref<4x7xf32, #tpu.memory_space<vmem>>, vector<4x7xf32>,
    %c0_40 = arith.constant 0 : index
    %c0_41 = arith.constant 0 : index
    %44 = vector.load %arg16[%c0_40, %c0_41] : memref<4x135xf32, #tpu.memory_space<vmem>>, vector<4x128xf32>
    %c0_42 = arith.constant 0 : index
    %45 = memref.load %arg10[%c0_42] : memref<1xf32, #tpu.memory_space<smem>>
    %46 = vector.broadcast %45 : f32 to vector<4x128xf32>
    %47 = arith.addf %44, %46 : vector<4x128xf32>
    %c0_43 = arith.constant 0 : index
    %c0_44 = arith.constant 0 : index
    %c0_45 = arith.constant 0 : index
    %48 = vector.load %arg13[%c0_43, %c0_44, %c0_45] : memref<1x4x128xf32, #tpu.memory_space<vmem>>, vector<1x4x128xf32>
    %49 = vector.shape_cast %48 : vector<1x4x128xf32> to vector<4x128xf32>
    %50 = vector.shape_cast %47 : vector<4x128xf32> to vector<1x4x128xf32>
    tpu.vector_store %arg13[%c0_43, %c0_44, %c0_45], %50 {strides = array<i32>} : memref<1x4x128xf32, #tpu.memory_space<vmem>>, vector<1x4x128xf32>,
    return
  }
  func.func @transform_0(%arg0: i32, %arg1: i32) -> (i32, i32, i32) {
    %c2_i32 = arith.constant 2 : i32
    %0 = arith.minsi %arg1, %c2_i32 : i32
    %c0_i32 = arith.constant 0 : i32
    %c0_i32_0 = arith.constant 0 : i32
    return %arg0, %c0_i32, %0 : i32, i32, i32
  }
  func.func @transform_1(%arg0: i32, %arg1: i32) -> (i32, i32, i32) {
    %c2_i32 = arith.constant 2 : i32
    %0 = arith.minsi %arg1, %c2_i32 : i32
    %c0_i32 = arith.constant 0 : i32
    %c0_i32_0 = arith.constant 0 : i32
    return %arg0, %c0_i32, %0 : i32, i32, i32
  }
  func.func @transform_2(%arg0: i32, %arg1: i32) -> (i32, i32, i32) {
    %c2_i32 = arith.constant 2 : i32
    %0 = arith.minsi %arg1, %c2_i32 : i32
    %c0_i32 = arith.constant 0 : i32
    %c0_i32_0 = arith.constant 0 : i32
    return %arg0, %c0_i32, %0 : i32, i32, i32
  }
  func.func @transform_3(%arg0: i32, %arg1: i32) -> (i32, i32) {
    %c0_i32 = arith.constant 0 : i32
    %c0_i32_0 = arith.constant 0 : i32
    %c0_i32_1 = arith.constant 0 : i32
    return %c0_i32, %c0_i32_0 : i32, i32
  }
  func.func @transform_4(%arg0: i32, %arg1: i32) -> (i32, i32) {
    %c0_i32 = arith.constant 0 : i32
    %c0_i32_0 = arith.constant 0 : i32
    %c0_i32_1 = arith.constant 0 : i32
    return %c0_i32, %c0_i32_0 : i32, i32
  }
  func.func @transform_5(%arg0: i32, %arg1: i32) -> (i32, i32) {
    %c0_i32 = arith.constant 0 : i32
    %c0_i32_0 = arith.constant 0 : i32
    %c0_i32_1 = arith.constant 0 : i32
    return %c0_i32, %c0_i32_0 : i32, i32
  }
  func.func @transform_6(%arg0: i32, %arg1: i32) -> i32 {
    %c0_i32 = arith.constant 0 : i32
    %c0_i32_0 = arith.constant 0 : i32
    return %c0_i32 : i32
  }
  func.func @transform_7(%arg0: i32, %arg1: i32) -> i32 {
    %c0_i32 = arith.constant 0 : i32
    %c0_i32_0 = arith.constant 0 : i32
    return %c0_i32 : i32
  }
  func.func @transform_8(%arg0: i32, %arg1: i32) -> i32 {
    %c0_i32 = arith.constant 0 : i32
    %c0_i32_0 = arith.constant 0 : i32
    return %c0_i32 : i32
  }
  func.func @transform_9(%arg0: i32, %arg1: i32) -> (i32, i32, i32) {
    %c0_i32 = arith.constant 0 : i32
    %c0_i32_0 = arith.constant 0 : i32
    return %arg0, %c0_i32, %arg1 : i32, i32, i32
  }
  func.func @transform_10(%arg0: i32, %arg1: i32) -> (i32, i32, i32) {
    %c0_i32 = arith.constant 0 : i32
    %c0_i32_0 = arith.constant 0 : i32
    return %arg0, %c0_i32, %arg1 : i32, i32, i32
  }
  func.func @transform_11(%arg0: i32, %arg1: i32) -> (i32, i32, i32) {
    %c0_i32 = arith.constant 0 : i32
    %c0_i32_0 = arith.constant 0 : i32
    return %arg0, %c0_i32, %arg1 : i32, i32, i32
  }
}

</mosaic_0001>

<llo_original>
// kernel: tpu_custom_call.1
$region0: #{tpu_custom_call.1}
  #allocation0 [shape = 'u32[]', space=smem, size = 0x4, offset = 0x4, fixed_abs, tag = 'smem constant byte address 0x4 - core index']
  #allocation1 [shape = 'u32[144,128]{1,0:T(1,128)}', space=vmem, size = 0x12000, scoped, tag = 'internal scratch']
  #allocation2 [shape = 'f32[4,129]{1,0:T(4,128)}', space=vmem, size = 0x1000, scoped, tag = 'scratch operand']
  #allocation3 [shape = 'f32[4,131]{1,0:T(4,128)}', space=vmem, size = 0x1000, scoped, tag = 'scratch operand']
  #allocation4 [shape = 'f32[4,135]{1,0:T(4,128)}', space=vmem, size = 0x1000, scoped, tag = 'scratch operand']
  #allocation5 [shape = 'f32[4,1]{1,0:T(4,128)}', space=vmem, size = 0x800, scoped, tag = 'scratch operand']
  #allocation6 [shape = 'f32[4,3]{1,0:T(4,128)}', space=vmem, size = 0x800, scoped, tag = 'scratch operand']
  #allocation7 [shape = 'f32[4,7]{1,0:T(4,128)}', space=vmem, size = 0x800, scoped, tag = 'scratch operand']
  #allocation8 [shape = 'f32[1]{0:T(128)S(6)}', space=smem, size = 0x200, scoped, tag = 'scoped memory for tpu_custom_call.1']
  #allocation9 [shape = 'f32[1]{0:T(128)S(6)}', space=smem, size = 0x200, scoped, tag = 'scoped memory for tpu_custom_call.1']
  #allocation10 [shape = 'f32[1]{0:T(128)S(6)}', space=smem, size = 0x200, scoped, tag = 'scoped memory for tpu_custom_call.1']
  %s0 = inlined_call_operand.hbm [shape: f32[2,16,384], index: 0, kind: input, shape index: {}]
  %s1 = inlined_call_operand.hbm [shape: f32[2,16,384], index: 1, kind: input, shape index: {}]
  %s2 = inlined_call_operand.hbm [shape: f32[2,16,384], index: 2, kind: input, shape index: {}]
  %s3 = inlined_call_operand.vmem [shape: f32[16,8], index: 3, kind: input, shape index: {}]
  %s4 = inlined_call_operand.vmem [shape: f32[16,16], index: 4, kind: input, shape index: {}]
  %s5 = inlined_call_operand.vmem [shape: f32[16,32], index: 5, kind: input, shape index: {}]
  %s6 = inlined_call_operand.<no memory space> [shape: f32[1], index: 6, kind: input, shape index: {}]
  %s7 = inlined_call_operand.<no memory space> [shape: f32[1], index: 7, kind: input, shape index: {}]
  %s8 = inlined_call_operand.<no memory space> [shape: f32[1], index: 8, kind: input, shape index: {}]
  %s9 = inlined_call_operand.hbm [shape: f32[2,4,512], index: 9, kind: output, shape index: {0}]
  %s10 = inlined_call_operand.hbm [shape: f32[2,4,512], index: 10, kind: output, shape index: {1}]
  %s11 = inlined_call_operand.hbm [shape: f32[2,4,512], index: 11, kind: output, shape index: {2}]
  %12 = xla_tuple %s9, %s10, %s11
  %s13 = sld [smem:[#allocation0]]
  $region121: #{tpu_custom_call.1} parent=0
    _
  %s15 = ssub.s32 1, %s13
  %s16 = scalar_select 0, %s15, %s13
  %17 = sst [smem:[#allocation8]] %s6
  %18 = sst [smem:[#allocation9]] %s7
  %19 = sst [smem:[#allocation10]] %s8
  $region1: #{tpu_custom_call.1} parent=0
    #allocation11 [shape = 'u8[16384]{0}', space=vmem, size = 0x4000, scoped, tag = 'input window, operand 0']
    #allocation12 [shape = 's32[2]{0}', space=sflag, size = 0x8, scoped, tag = 'scoped memory for tpu_custom_call.1']
    #allocation13 [shape = 's32[2]{0}', space=sflag, size = 0x8, scoped, tag = 'scoped memory for tpu_custom_call.1']
    #allocation14 [shape = 'u8[16384]{0}', space=vmem, size = 0x4000, scoped, tag = 'input window, operand 1']
    #allocation15 [shape = 's32[2]{0}', space=sflag, size = 0x8, scoped, tag = 'scoped memory for tpu_custom_call.1']
    #allocation16 [shape = 'u8[16384]{0}', space=vmem, size = 0x4000, scoped, tag = 'input window, operand 2']
    #allocation17 [shape = 'u8[4096]{0}', space=vmem, size = 0x1000, scoped, tag = 'output window, operand 0']
    #allocation18 [shape = 'u8[4096]{0}', space=vmem, size = 0x1000, scoped, tag = 'output window, operand 1']
    #allocation19 [shape = 's32[2]{0}', space=sflag, size = 0x8, scoped, tag = 'scoped memory for tpu_custom_call.1']
    #allocation20 [shape = 'u8[4096]{0}', space=vmem, size = 0x1000, scoped, tag = 'output window, operand 2']
    %20 = vsyncpa [#allocation12], 0
    %s21 = scalar_lea.sflag [#allocation12], 1
    %22 = vsyncpa %s21, 0
    %23 = vsyncpa [#allocation15], 0
    %s24 = scalar_lea.sflag [#allocation15], 1
    %25 = vsyncpa %s24, 0
    %26 = vsyncpa [#allocation13], 0
    %s27 = scalar_lea.sflag [#allocation13], 1
    %28 = vsyncpa %s27, 0
    %29 = vsyncpa [#allocation19], 0
    %s30 = scalar_lea.sflag [#allocation19], 1
    %31 = vsyncpa %s30, 0
    loop: start=0, step=1, limit=10
    $region2: #{tpu_custom_call.1} parent=1 // loop_pre_header
      _
    $region3: #{tpu_custom_call.1} parent=1 // loop_header
      %s33 = sphi 0, %s37
      %p34 = scmp.ge.s32.totalorder %s33, 10
      %s40 = sphi 0, %s52
      %s41 = sphi 0, %s48
      %s42 = sphi 0, %s40
      %s43 = sphi 0, %s41
      %s44 = sphi 0, %s42
      %s45 = sphi 0, %s43
      %s61 = sphi 0, %s63
      %s64 = sphi 0, %s61
      %s65 = sphi 0, %s64
      %s81 = sphi 0, %s65
      %s93 = sphi 0, %s95
      %s96 = sphi 0, %s93
      %s97 = sphi 0, %s96
      %s113 = sphi 0, %s97
      %s125 = sphi 0, %s127
      %s128 = sphi 0, %s125
      %s129 = sphi 0, %s128
      %s145 = sphi 0, %s129
      %s149 = sphi 0, %s149
      %s151 = sphi 0, %s149
      %s152 = sphi 0, %s151
      %s166 = sphi 0, %s152
      %s170 = sphi 0, %s170
      %s172 = sphi 0, %s170
      %s173 = sphi 0, %s172
      %s187 = sphi 0, %s173
      %s191 = sphi 0, %s191
      %s193 = sphi 0, %s191
      %s194 = sphi 0, %s193
      %s208 = sphi 0, %s194
      %s212 = sphi 0, %s212
      %s214 = sphi 0, %s212
      %s215 = sphi 0, %s214
      %s229 = sphi 0, %s215
      %s233 = sphi 0, %s233
      %s235 = sphi 0, %s233
      %s236 = sphi 0, %s235
      %s250 = sphi 0, %s236
      %s254 = sphi 0, %s254
      %s256 = sphi 0, %s254
      %s257 = sphi 0, %s256
      %s271 = sphi 0, %s257
      %s279 = sphi 0, %s281
      %s282 = sphi 0, %s279
      %s283 = sphi 0, %s282
      %s299 = sphi 0, %s283
      %s307 = sphi 0, %s309
      %s310 = sphi 0, %s307
      %s311 = sphi 0, %s310
      %s327 = sphi 0, %s311
      %s335 = sphi 0, %s337
      %s338 = sphi 0, %s335
      %s339 = sphi 0, %s338
      %s355 = sphi 0, %s339
    $region4: #{tpu_custom_call.1} parent=1 // loop_header_branch
      %36 = sbr.rel (%p34) target = $region8
    $region5: #{tpu_custom_call.1} parent=1 // loop_body
      %s38 = ssub.s32 %s33, 1
      %s39 = ssub.s32 %s33, 2
      %s46 = sadd.s32 1, %s41
      %p47 = scmp.ge.s32.totalorder %s46, 4
      %s48 = scalar_select %p47, 0, %s46
      %s49 = sadd.s32 1, %s40
      %s50 = scalar_select %p47, %s49, %s40
      %p51 = scmp.ge.s32.totalorder %s50, 2
      %s52 = scalar_select %p51, 0, %s50
      %p53 = scmp.lt.s32.totalorder %s41, 2
      %s54 = scalar_select %p53, %s41, 2
      %p55 = scmp.lt.s32.totalorder %s48, 2
      %s56 = scalar_select %p55, %s48, 2
      %s57 = ssub.s32 %s40, %s52
      %s58 = ssub.s32 %s54, %s56
      %s59 = sor.u32 %s57, %s58
      %p60 = scmp.eq.s32.totalorder %s59, 0
      %s62 = sadd.s32 %s61, 1
      %s63 = scalar_select %p60, %s61, %s62
      %p66 = pneg %p60
      %p67 = scmp.eq.s32.totalorder %s33, 7
      %p68 = por %p66, %p67
      %p69 = scmp.ne.s32.totalorder %s61, %s64
      %p70 = scmp.eq.s32.totalorder %s33, 0
      %p71 = por %p69, %p70
      %p72 = scmp.ne.s32.totalorder %s61, %s64
      %p73 = scmp.eq.s32.totalorder %s38, 7
      %p74 = por %p72, %p73
      %p75 = scmp.ne.s32.totalorder %s64, %s65
      %p76 = scmp.eq.s32.totalorder %s38, 0
      %p77 = por %p75, %p76
      %p78 = scmp.ne.s32.totalorder %s64, %s65
      %p79 = scmp.eq.s32.totalorder %s39, 7
      %p80 = por %p78, %p79
      %p82 = scmp.ne.s32.totalorder %s65, %s81
      %p83 = scmp.eq.s32.totalorder %s39, 0
      %p84 = por %p82, %p83
      %p85 = scmp.lt.s32.totalorder %s41, 2
      %s86 = scalar_select %p85, %s41, 2
      %p87 = scmp.lt.s32.totalorder %s48, 2
      %s88 = scalar_select %p87, %s48, 2
      %s89 = ssub.s32 %s40, %s52
      %s90 = ssub.s32 %s86, %s88
      %s91 = sor.u32 %s89, %s90
      %p92 = scmp.eq.s32.totalorder %s91, 0
      %s94 = sadd.s32 %s93, 1
      %s95 = scalar_select %p92, %s93, %s94
      %p98 = pneg %p92
      %p99 = scmp.eq.s32.totalorder %s33, 7
      %p100 = por %p98, %p99
      %p101 = scmp.ne.s32.totalorder %s93, %s96
      %p102 = scmp.eq.s32.totalorder %s33, 0
      %p103 = por %p101, %p102
      %p104 = scmp.ne.s32.totalorder %s93, %s96
      %p105 = scmp.eq.s32.totalorder %s38, 7
      %p106 = por %p104, %p105
      %p107 = scmp.ne.s32.totalorder %s96, %s97
      %p108 = scmp.eq.s32.totalorder %s38, 0
      %p109 = por %p107, %p108
      %p110 = scmp.ne.s32.totalorder %s96, %s97
      %p111 = scmp.eq.s32.totalorder %s39, 7
      %p112 = por %p110, %p111
      %p114 = scmp.ne.s32.totalorder %s97, %s113
      %p115 = scmp.eq.s32.totalorder %s39, 0
      %p116 = por %p114, %p115
      %p117 = scmp.lt.s32.totalorder %s41, 2
      %s118 = scalar_select %p117, %s41, 2
      %p119 = scmp.lt.s32.totalorder %s48, 2
      %s120 = scalar_select %p119, %s48, 2
      %s121 = ssub.s32 %s40, %s52
      %s122 = ssub.s32 %s118, %s120
      %s123 = sor.u32 %s121, %s122
      %p124 = scmp.eq.s32.totalorder %s123, 0
      %s126 = sadd.s32 %s125, 1
      %s127 = scalar_select %p124, %s125, %s126
      %p130 = pneg %p124
      %p131 = scmp.eq.s32.totalorder %s33, 7
      %p132 = por %p130, %p131
      %p133 = scmp.ne.s32.totalorder %s125, %s128
      %p134 = scmp.eq.s32.totalorder %s33, 0
      %p135 = por %p133, %p134
      %p136 = scmp.ne.s32.totalorder %s125, %s128
      %p137 = scmp.eq.s32.totalorder %s38, 7
      %p138 = por %p136, %p137
      %p139 = scmp.ne.s32.totalorder %s128, %s129
      %p140 = scmp.eq.s32.totalorder %s38, 0
      %p141 = por %p139, %p140
      %p142 = scmp.ne.s32.totalorder %s128, %s129
      %p143 = scmp.eq.s32.totalorder %s39, 7
      %p144 = por %p142, %p143
      %p146 = scmp.ne.s32.totalorder %s129, %s145
      %p147 = scmp.eq.s32.totalorder %s39, 0
      %p148 = por %p146, %p147
      %s150 = sadd.s32 %s149, 1
      %p153 = scmp.eq.s32.totalorder %s33, 7
      %p154 = scmp.ne.s32.totalorder %s149, %s151
      %p155 = scmp.eq.s32.totalorder %s33, 0
      %p156 = por %p154, %p155
      %p157 = scmp.ne.s32.totalorder %s149, %s151
      %p158 = scmp.eq.s32.totalorder %s38, 7
      %p159 = por %p157, %p158
      %p160 = scmp.ne.s32.totalorder %s151, %s152
      %p161 = scmp.eq.s32.totalorder %s38, 0
      %p162 = por %p160, %p161
      %p163 = scmp.ne.s32.totalorder %s151, %s152
      %p164 = scmp.eq.s32.totalorder %s39, 7
      %p165 = por %p163, %p164
      %p167 = scmp.ne.s32.totalorder %s152, %s166
      %p168 = scmp.eq.s32.totalorder %s39, 0
      %p169 = por %p167, %p168
      %s171 = sadd.s32 %s170, 1
      %p174 = scmp.eq.s32.totalorder %s33, 7
      %p175 = scmp.ne.s32.totalorder %s170, %s172
      %p176 = scmp.eq.s32.totalorder %s33, 0
      %p177 = por %p175, %p176
      %p178 = scmp.ne.s32.totalorder %s170, %s172
      %p179 = scmp.eq.s32.totalorder %s38, 7
      %p180 = por %p178, %p179
      %p181 = scmp.ne.s32.totalorder %s172, %s173
      %p182 = scmp.eq.s32.totalorder %s38, 0
      %p183 = por %p181, %p182
      %p184 = scmp.ne.s32.totalorder %s172, %s173
      %p185 = scmp.eq.s32.totalorder %s39, 7
      %p186 = por %p184, %p185
      %p188 = scmp.ne.s32.totalorder %s173, %s187
      %p189 = scmp.eq.s32.totalorder %s39, 0
      %p190 = por %p188, %p189
      %s192 = sadd.s32 %s191, 1
      %p195 = scmp.eq.s32.totalorder %s33, 7
      %p196 = scmp.ne.s32.totalorder %s191, %s193
      %p197 = scmp.eq.s32.totalorder %s33, 0
      %p198 = por %p196, %p197
      %p199 = scmp.ne.s32.totalorder %s191, %s193
      %p200 = scmp.eq.s32.totalorder %s38, 7
      %p201 = por %p199, %p200
      %p202 = scmp.ne.s32.totalorder %s193, %s194
      %p203 = scmp.eq.s32.totalorder %s38, 0
      %p204 = por %p202, %p203
      %p205 = scmp.ne.s32.totalorder %s193, %s194
      %p206 = scmp.eq.s32.totalorder %s39, 7
      %p207 = por %p205, %p206
      %p209 = scmp.ne.s32.totalorder %s194, %s208
      %p210 = scmp.eq.s32.totalorder %s39, 0
      %p211 = por %p209, %p210
      %s213 = sadd.s32 %s212, 1
      %p216 = scmp.eq.s32.totalorder %s33, 7
      %p217 = scmp.ne.s32.totalorder %s212, %s214
      %p218 = scmp.eq.s32.totalorder %s33, 0
      %p219 = por %p217, %p218
      %p220 = scmp.ne.s32.totalorder %s212, %s214
      %p221 = scmp.eq.s32.totalorder %s38, 7
      %p222 = por %p220, %p221
      %p223 = scmp.ne.s32.totalorder %s214, %s215
      %p224 = scmp.eq.s32.totalorder %s38, 0
      %p225 = por %p223, %p224
      %p226 = scmp.ne.s32.totalorder %s214, %s215
      %p227 = scmp.eq.s32.totalorder %s39, 7
      %p228 = por %p226, %p227
      %p230 = scmp.ne.s32.totalorder %s215, %s229
      %p231 = scmp.eq.s32.totalorder %s39, 0
      %p232 = por %p230, %p231
      %s234 = sadd.s32 %s233, 1
      %p237 = scmp.eq.s32.totalorder %s33, 7
      %p238 = scmp.ne.s32.totalorder %s233, %s235
      %p239 = scmp.eq.s32.totalorder %s33, 0
      %p240 = por %p238, %p239
      %p241 = scmp.ne.s32.totalorder %s233, %s235
      %p242 = scmp.eq.s32.totalorder %s38, 7
      %p243 = por %p241, %p242
      %p244 = scmp.ne.s32.totalorder %s235, %s236
      %p245 = scmp.eq.s32.totalorder %s38, 0
      %p246 = por %p244, %p245
      %p247 = scmp.ne.s32.totalorder %s235, %s236
      %p248 = scmp.eq.s32.totalorder %s39, 7
      %p249 = por %p247, %p248
      %p251 = scmp.ne.s32.totalorder %s236, %s250
      %p252 = scmp.eq.s32.totalorder %s39, 0
      %p253 = por %p251, %p252
      %s255 = sadd.s32 %s254, 1
      %p258 = scmp.eq.s32.totalorder %s33, 7
      %p259 = scmp.ne.s32.totalorder %s254, %s256
      %p260 = scmp.eq.s32.totalorder %s33, 0
      %p261 = por %p259, %p260
      %p262 = scmp.ne.s32.totalorder %s254, %s256
      %p263 = scmp.eq.s32.totalorder %s38, 7
      %p264 = por %p262, %p263
      %p265 = scmp.ne.s32.totalorder %s256, %s257
      %p266 = scmp.eq.s32.totalorder %s38, 0
      %p267 = por %p265, %p266
      %p268 = scmp.ne.s32.totalorder %s256, %s257
      %p269 = scmp.eq.s32.totalorder %s39, 7
      %p270 = por %p268, %p269
      %p272 = scmp.ne.s32.totalorder %s257, %s271
      %p273 = scmp.eq.s32.totalorder %s39, 0
      %p274 = por %p272, %p273
      %s275 = ssub.s32 %s40, %s52
      %s276 = ssub.s32 %s41, %s48
      %s277 = sor.u32 %s275, %s276
      %p278 = scmp.eq.s32.totalorder %s277, 0
      %s280 = sadd.s32 %s279, 1
      %s281 = scalar_select %p278, %s279, %s280
      %p284 = pneg %p278
      %p285 = scmp.eq.s32.totalorder %s33, 7
      %p286 = por %p284, %p285
      %p287 = scmp.ne.s32.totalorder %s279, %s282
      %p288 = scmp.eq.s32.totalorder %s33, 0
      %p289 = por %p287, %p288
      %p290 = scmp.ne.s32.totalorder %s279, %s282
      %p291 = scmp.eq.s32.totalorder %s38, 7
      %p292 = por %p290, %p291
      %p293 = scmp.ne.s32.totalorder %s282, %s283
      %p294 = scmp.eq.s32.totalorder %s38, 0
      %p295 = por %p293, %p294
      %p296 = scmp.ne.s32.totalorder %s282, %s283
      %p297 = scmp.eq.s32.totalorder %s39, 7
      %p298 = por %p296, %p297
      %p300 = scmp.ne.s32.totalorder %s283, %s299
      %p301 = scmp.eq.s32.totalorder %s39, 0
      %p302 = por %p300, %p301
      %s303 = ssub.s32 %s40, %s52
      %s304 = ssub.s32 %s41, %s48
      %s305 = sor.u32 %s303, %s304
      %p306 = scmp.eq.s32.totalorder %s305, 0
      %s308 = sadd.s32 %s307, 1
      %s309 = scalar_select %p306, %s307, %s308
      %p312 = pneg %p306
      %p313 = scmp.eq.s32.totalorder %s33, 7
      %p314 = por %p312, %p313
      %p315 = scmp.ne.s32.totalorder %s307, %s310
      %p316 = scmp.eq.s32.totalorder %s33, 0
      %p317 = por %p315, %p316
      %p318 = scmp.ne.s32.totalorder %s307, %s310
      %p319 = scmp.eq.s32.totalorder %s38, 7
      %p320 = por %p318, %p319
      %p321 = scmp.ne.s32.totalorder %s310, %s311
      %p322 = scmp.eq.s32.totalorder %s38, 0
      %p323 = por %p321, %p322
      %p324 = scmp.ne.s32.totalorder %s310, %s311
      %p325 = scmp.eq.s32.totalorder %s39, 7
      %p326 = por %p324, %p325
      %p328 = scmp.ne.s32.totalorder %s311, %s327
      %p329 = scmp.eq.s32.totalorder %s39, 0
      %p330 = por %p328, %p329
      %s331 = ssub.s32 %s40, %s52
      %s332 = ssub.s32 %s41, %s48
      %s333 = sor.u32 %s331, %s332
      %p334 = scmp.eq.s32.totalorder %s333, 0
      %s336 = sadd.s32 %s335, 1
      %s337 = scalar_select %p334, %s335, %s336
      %p340 = pneg %p334
      %p341 = scmp.eq.s32.totalorder %s33, 7
      %p342 = por %p340, %p341
      %p343 = scmp.ne.s32.totalorder %s335, %s338
      %p344 = scmp.eq.s32.totalorder %s33, 0
      %p345 = por %p343, %p344
      %p346 = scmp.ne.s32.totalorder %s335, %s338
      %p347 = scmp.eq.s32.totalorder %s38, 7
      %p348 = por %p346, %p347
      %p349 = scmp.ne.s32.totalorder %s338, %s339
      %p350 = scmp.eq.s32.totalorder %s38, 0
      %p351 = por %p349, %p350
      %p352 = scmp.ne.s32.totalorder %s338, %s339
      %p353 = scmp.eq.s32.totalorder %s39, 7
      %p354 = por %p352, %p353
      %p356 = scmp.ne.s32.totalorder %s339, %s355
      %p357 = scmp.eq.s32.totalorder %s39, 0
      %p358 = por %p356, %p357
      %p359 = scmp.le.s32.totalorder 1, %s33
      %p360 = scmp.lt.s32.totalorder %s33, 9
      %p361 = pnand %p359, %p360
      %p362 = pneg %p361
      // Predicated region
      $region9: #{tpu_custom_call.1} parent=5 // pred_check
        _
      $region10: #{tpu_custom_call.1} parent=5 // pred_check_branch
        %364 = sbr.rel (%p361) target = $region12
      $region11: #{tpu_custom_call.1} parent=5 // pred_region
        %s365 = ssub.s32 %s33, 1
        // Predicated region
        $region13: #{tpu_custom_call.1} parent=11 // pred_check
          %p366 = pneg %p162
        $region14: #{tpu_custom_call.1} parent=11 // pred_check_branch
          %368 = sbr.rel (%p366) target = $region16
        $region15: #{tpu_custom_call.1} parent=11 // pred_region
          _
        $region16: #{tpu_custom_call.1} parent=11 // pred_fallthru
          _
        // Predicated region
        $region17: #{tpu_custom_call.1} parent=11 // pred_check
          %p369 = pneg %p183
        $region18: #{tpu_custom_call.1} parent=11 // pred_check_branch
          %371 = sbr.rel (%p369) target = $region20
        $region19: #{tpu_custom_call.1} parent=11 // pred_region
          _
        $region20: #{tpu_custom_call.1} parent=11 // pred_fallthru
          _
        // Predicated region
        $region21: #{tpu_custom_call.1} parent=11 // pred_check
          %p372 = pneg %p204
        $region22: #{tpu_custom_call.1} parent=11 // pred_check_branch
          %374 = sbr.rel (%p372) target = $region24
        $region23: #{tpu_custom_call.1} parent=11 // pred_region
          _
        $region24: #{tpu_custom_call.1} parent=11 // pred_fallthru
          _
        // Predicated region
        $region25: #{tpu_custom_call.1} parent=11 // pred_check
          %p375 = pneg %p225
        $region26: #{tpu_custom_call.1} parent=11 // pred_check_branch
          %377 = sbr.rel (%p375) target = $region28
        $region27: #{tpu_custom_call.1} parent=11 // pred_region
          _
        $region28: #{tpu_custom_call.1} parent=11 // pred_fallthru
          _
        // Predicated region
        $region29: #{tpu_custom_call.1} parent=11 // pred_check
          %p378 = pneg %p246
        $region30: #{tpu_custom_call.1} parent=11 // pred_check_branch
          %380 = sbr.rel (%p378) target = $region32
        $region31: #{tpu_custom_call.1} parent=11 // pred_region
          _
        $region32: #{tpu_custom_call.1} parent=11 // pred_fallthru
          _
        // Predicated region
        $region33: #{tpu_custom_call.1} parent=11 // pred_check
          %p381 = pneg %p267
        $region34: #{tpu_custom_call.1} parent=11 // pred_check_branch
          %383 = sbr.rel (%p381) target = $region36
        $region35: #{tpu_custom_call.1} parent=11 // pred_region
          _
        $region36: #{tpu_custom_call.1} parent=11 // pred_fallthru
          _
      $region12: #{tpu_custom_call.1} parent=5 // pred_fallthru
        _
      %p384 = scmp.lt.s32.totalorder %s33, 8
      // Predicated region
      $region37: #{tpu_custom_call.1} parent=5 // pred_check
        %p385 = pneg %p384
      $region38: #{tpu_custom_call.1} parent=5 // pred_check_branch
        %387 = sbr.rel (%p385) target = $region40
      $region39: #{tpu_custom_call.1} parent=5 // pred_region
        // Predicated region
        $region41: #{tpu_custom_call.1} parent=39 // pred_check
          %p388 = pneg %p71
        $region42: #{tpu_custom_call.1} parent=39 // pred_check_branch
          %390 = sbr.rel (%p388) target = $region44
        $region43: #{tpu_custom_call.1} parent=39 // pred_region
          %s391 = sand.u32 %s61, 1
          %s392 = scalar_lea.sflag [#allocation12], %s391
          %s393 = sand.u32 %s61, 1
          %s394 = smul.addr %s393, 16
          %s395 = scalar_lea.vmem [#allocation11], %s394
          %p396 = scmp.lt.s32.totalorder %s41, 2
          %s397 = scalar_select %p396, %s41, 2
          %s399 = ssub.s32 256, 256
          %400 = vsyncadd %s392, %s399
          %s401 = smul.addr %s40, 6
          %s402 = sadd.s32 %s397, %s401
          %s403 = smul.addr %s402, 128
          %s404 = scalar_lea.hbm %s0, %s403
          %s405 = sshll.u32 %s395, 4
          %s406 = int_to_ptr.vmem [resolvable:$true] %s405
          %411 = dma.hbm_to_vmem [thread:$0]  %s404, 256, %s406, %s392, 384, 128, 8
        $region44: #{tpu_custom_call.1} parent=39 // pred_fallthru
          _
        // Predicated region
        $region45: #{tpu_custom_call.1} parent=39 // pred_check
          %p412 = pneg %p103
        $region46: #{tpu_custom_call.1} parent=39 // pred_check_branch
          %414 = sbr.rel (%p412) target = $region48
        $region47: #{tpu_custom_call.1} parent=39 // pred_region
          %s415 = sand.u32 %s33, 1
          %s416 = scalar_lea.sflag [#allocation15], %s415
          %s417 = sand.u32 %s93, 1
          %s418 = smul.addr %s417, 16
          %s419 = scalar_lea.vmem [#allocation14], %s418
          %p420 = scmp.lt.s32.totalorder %s41, 2
          %s421 = scalar_select %p420, %s41, 2
          %s423 = ssub.s32 256, 256
          %424 = vsyncadd %s416, %s423
          %s425 = smul.addr %s40, 6
          %s426 = sadd.s32 %s421, %s425
          %s427 = smul.addr %s426, 128
          %s428 = scalar_lea.hbm %s1, %s427
          %s429 = sshll.u32 %s419, 4
          %s430 = int_to_ptr.vmem [resolvable:$true] %s429
          %435 = dma.hbm_to_vmem [thread:$0]  %s428, 256, %s430, %s416, 384, 128, 8
        $region48: #{tpu_custom_call.1} parent=39 // pred_fallthru
          _
        // Predicated region
        $region49: #{tpu_custom_call.1} parent=39 // pred_check
          %p436 = pneg %p135
        $region50: #{tpu_custom_call.1} parent=39 // pred_check_branch
          %438 = sbr.rel (%p436) target = $region52
        $region51: #{tpu_custom_call.1} parent=39 // pred_region
          %s439 = sand.u32 %s33, 1
          %s440 = scalar_lea.sflag [#allocation15], %s439
          %s441 = sand.u32 %s125, 1
          %s442 = smul.addr %s441, 16
          %s443 = scalar_lea.vmem [#allocation16], %s442
          %p444 = scmp.lt.s32.totalorder %s41, 2
          %s445 = scalar_select %p444, %s41, 2
          %s447 = ssub.s32 256, 256
          %448 = vsyncadd %s440, %s447
          %s449 = smul.addr %s40, 6
          %s450 = sadd.s32 %s445, %s449
          %s451 = smul.addr %s450, 128
          %s452 = scalar_lea.hbm %s2, %s451
          %s453 = sshll.u32 %s443, 4
          %s454 = int_to_ptr.vmem [resolvable:$true] %s453
          %459 = dma.hbm_to_vmem [thread:$0]  %s452, 256, %s454, %s440, 384, 128, 8
        $region52: #{tpu_custom_call.1} parent=39 // pred_fallthru
          _
      $region40: #{tpu_custom_call.1} parent=5 // pred_fallthru
        _
      %p460 = scmp.le.s32.totalorder 1, %s33
      %p461 = scmp.lt.s32.totalorder %s33, 9
      %p462 = pnand %p460, %p461
      %p463 = pneg %p462
      // Predicated region
      $region53: #{tpu_custom_call.1} parent=5 // pred_check
        _
      $region54: #{tpu_custom_call.1} parent=5 // pred_check_branch
        %465 = sbr.rel (%p462) target = $region56
      $region55: #{tpu_custom_call.1} parent=5 // pred_region
        %s466 = ssub.s32 %s33, 1
        %s467 = sand.u32 %s64, 1
        %s468 = scalar_lea.sflag [#allocation12], %s467
        %s469 = sand.u32 %s64, 1
        %s470 = smul.addr %s469, 16
        %s471 = scalar_lea.vmem [#allocation11], %s470
        // Predicated region
        $region57: #{tpu_custom_call.1} parent=55 // pred_check
          %p472 = pneg %p77
        $region58: #{tpu_custom_call.1} parent=55 // pred_check_branch
          %474 = sbr.rel (%p472) target = $region60
        $region59: #{tpu_custom_call.1} parent=55 // pred_region
          %475 = dma.done %s468, 256
        $region60: #{tpu_custom_call.1} parent=55 // pred_fallthru
          _
        %s476 = sand.u32 %s38, 1
        %s477 = scalar_lea.sflag [#allocation15], %s476
        %s478 = sand.u32 %s96, 1
        %s479 = smul.addr %s478, 16
        %s480 = scalar_lea.vmem [#allocation14], %s479
        // Predicated region
        $region61: #{tpu_custom_call.1} parent=55 // pred_check
          %p481 = pneg %p109
        $region62: #{tpu_custom_call.1} parent=55 // pred_check_branch
          %483 = sbr.rel (%p481) target = $region64
        $region63: #{tpu_custom_call.1} parent=55 // pred_region
          %484 = dma.done %s477, 256
        $region64: #{tpu_custom_call.1} parent=55 // pred_fallthru
          _
        %s485 = sand.u32 %s38, 1
        %s486 = scalar_lea.sflag [#allocation15], %s485
        %s487 = sand.u32 %s128, 1
        %s488 = smul.addr %s487, 16
        %s489 = scalar_lea.vmem [#allocation16], %s488
        // Predicated region
        $region65: #{tpu_custom_call.1} parent=55 // pred_check
          %p490 = pneg %p141
        $region66: #{tpu_custom_call.1} parent=55 // pred_check_branch
          %492 = sbr.rel (%p490) target = $region68
        $region67: #{tpu_custom_call.1} parent=55 // pred_region
          %493 = dma.done %s486, 256
        $region68: #{tpu_custom_call.1} parent=55 // pred_fallthru
          _
        %s494 = sand.u32 %s64, 1
        %s495 = scalar_lea.sflag [#allocation12], %s494
        %s496 = sand.u32 %s64, 1
        %s497 = smul.addr %s496, 16
        %s498 = scalar_lea.vmem [#allocation11], %s497
        %p499 = pneg %p77
        %p500 = pneg %p74
        %s501 = sand.u32 %s38, 1
        %s502 = scalar_lea.sflag [#allocation15], %s501
        %s503 = sand.u32 %s96, 1
        %s504 = smul.addr %s503, 16
        %s505 = scalar_lea.vmem [#allocation14], %s504
        %p506 = pneg %p109
        %p507 = pneg %p106
        %s508 = sand.u32 %s38, 1
        %s509 = scalar_lea.sflag [#allocation15], %s508
        %s510 = sand.u32 %s128, 1
        %s511 = smul.addr %s510, 16
        %s512 = scalar_lea.vmem [#allocation16], %s511
        %p513 = pneg %p141
        %p514 = pneg %p138
        %p515 = pneg %p162
        %p516 = pneg %p159
        %p517 = pneg %p183
        %p518 = pneg %p180
        %p519 = pneg %p204
        %p520 = pneg %p201
        %p521 = pneg %p225
        %p522 = pneg %p222
        %p523 = pneg %p246
        %p524 = pneg %p243
        %p525 = pneg %p267
        %p526 = pneg %p264
        %p527 = pneg %p295
        %p528 = pneg %p292
        %s529 = sand.u32 %s282, 1
        %s530 = scalar_lea.sflag [#allocation13], %s529
        %s531 = sand.u32 %s282, 1
        %s532 = smul.addr %s531, 4
        %s533 = scalar_lea.vmem [#allocation17], %s532
        %p534 = pneg %p323
        %p535 = pneg %p320
        %s536 = sand.u32 %s38, 1
        %s537 = scalar_lea.sflag [#allocation19], %s536
        %s538 = sand.u32 %s310, 1
        %s539 = smul.addr %s538, 4
        %s540 = scalar_lea.vmem [#allocation18], %s539
        %p541 = pneg %p351
        %p542 = pneg %p348
        %s543 = sand.u32 %s38, 1
        %s544 = scalar_lea.sflag [#allocation19], %s543
        %s545 = sand.u32 %s338, 1
        %s546 = smul.addr %s545, 4
        %s547 = scalar_lea.vmem [#allocation20], %s546
        %p548 = scmp.lt.s32.totalorder %s43, 2
        %s549 = scalar_select %p548, %s43, 2
        %p550 = scmp.lt.s32.totalorder %s43, 2
        %s551 = scalar_select %p550, %s43, 2
        %p552 = scmp.lt.s32.totalorder %s43, 2
        %s553 = scalar_select %p552, %s43, 2
        %vm554 = vcmask 1043456
        %vm555 = vcmask 7172
        %vm556 = vmor %vm555, %vm554
        %557 = vst.msk [vmem:[#allocation2] sm:$0xff] %vm556, 0.0
        %p558 = scmp.lt.s32.totalorder %s43, 3
        // Predicated region
        $region69: #{tpu_custom_call.1} parent=55 // pred_check
          %p559 = pneg %p558
        $region70: #{tpu_custom_call.1} parent=55 // pred_check_branch
          %561 = sbr.rel (%p559) target = $region72
        $region71: #{tpu_custom_call.1} parent=55 // pred_region
          %v562 = vld [vmem:[%s471] sm:$0xff]
          %v563 = vld [vmem:[%s471 + $0x8] sm:$0xff]
          %v564 = vld [vmem:[%s3] sm:$0xff]
          %v565 = vld [vmem:[%s3 + $0x8] sm:$0xff]
          %566 = vxpose.xlu0.b32.start [1/16] %v564, 128
          %567 = vxpose.xlu0.b32.cont [2/16] %v565, 128
          %568 = vxpose.xlu0.b32.cont [3/16] 0.0, 128
          %569 = vxpose.xlu0.b32.cont [4/16] 0.0, 128
          %570 = vxpose.xlu0.b32.cont [5/16] 0.0, 128
          %571 = vxpose.xlu0.b32.cont [6/16] 0.0, 128
          %572 = vxpose.xlu0.b32.cont [7/16] 0.0, 128
          %573 = vxpose.xlu0.b32.cont [8/16] 0.0, 128
          %574 = vxpose.xlu0.b32.cont [9/16] 0.0, 128
          %575 = vxpose.xlu0.b32.cont [10/16] 0.0, 128
          %576 = vxpose.xlu0.b32.cont [11/16] 0.0, 128
          %577 = vxpose.xlu0.b32.cont [12/16] 0.0, 128
          %578 = vxpose.xlu0.b32.cont [13/16] 0.0, 128
          %579 = vxpose.xlu0.b32.cont [14/16] 0.0, 128
          %580 = vxpose.xlu0.b32.cont [15/16] 0.0, 128
          %581 = vxpose.xlu0.b32.end [16/16] 0.0, 128
          %v582 = vpop.trf.xlu0
          %v583 = vpop.trf.xlu0
          %v584 = vpop.trf.xlu0
          %v585 = vpop.trf.xlu0
          %v586 = vpop.trf.xlu0
          %v587 = vpop.trf.xlu0
          %v588 = vpop.trf.xlu0
          %v589 = vpop.trf.xlu0
          %v590 = vpop.trf.xlu0
          %v591 = vpop.trf.xlu0
          %v592 = vpop.trf.xlu0
          %v593 = vpop.trf.xlu0
          %v594 = vpop.trf.xlu0
          %v595 = vpop.trf.xlu0
          %v596 = vpop.trf.xlu0
          %v597 = vpop.trf.xlu0
          %vm598 = vcmask 130048
          %v600 = vsel %vm598, %v582, 0
          %602 = vmatprep.subr.mxu0 0.0
          %603 = vmatpush1.msra.mxu0 %v562
          %604 = vmatprep.subr.mxu0 0.0
          %605 = vmatpush1.msra.mxu0 %v563
          %606 = vmatprep.subr.mxu0 0.0
          %607 = vmatpush1.msra.mxu0 0.0
          %608 = vmatprep.subr.mxu0 0.0
          %609 = vmatpush1.msra.mxu0 0.0
          %610 = vmatprep.subr.mxu0 0.0
          %611 = vmatpush1.msra.mxu0 0.0
          %612 = vmatprep.subr.mxu0 0.0
          %613 = vmatpush1.msra.mxu0 0.0
          %614 = vmatprep.subr.mxu0 0.0
          %615 = vmatpush1.msra.mxu0 0.0
          %616 = vmatprep.subr.mxu0 0.0
          %617 = vmatpush1.msra.mxu0 0.0
          %618 = vmatprep.subr.mxu0 0.0
          %619 = vmatpush1.msra.mxu0 0.0
          %620 = vmatprep.subr.mxu0 0.0
          %621 = vmatpush1.msra.mxu0 0.0
          %622 = vmatprep.subr.mxu0 0.0
          %623 = vmatpush1.msra.mxu0 0.0
          %624 = vmatprep.subr.mxu0 0.0
          %625 = vmatpush1.msra.mxu0 0.0
          %626 = vmatprep.subr.mxu0 0.0
          %627 = vmatpush1.msra.mxu0 0.0
          %628 = vmatprep.subr.mxu0 0.0
          %629 = vmatpush1.msra.mxu0 0.0
          %630 = vmatprep.subr.mxu0 0.0
          %631 = vmatpush1.msra.mxu0 0.0
          %632 = vmatprep.subr.mxu0 0.0
          %633 = vmatpush1.msra.mxu0 0.0
          %634 = vmatprep.subr.mxu0 0.0
          %635 = vmatpush1.msra.mxu0 0.0
          %636 = vmatprep.subr.mxu0 0.0
          %637 = vmatpush1.msra.mxu0 0.0
          %638 = vmatprep.subr.mxu0 0.0
          %639 = vmatpush1.msra.mxu0 0.0
          %640 = vmatprep.subr.mxu0 0.0
          %641 = vmatpush1.msra.mxu0 0.0
          %642 = vmatprep.subr.mxu0 0.0
          %643 = vmatpush1.msra.mxu0 0.0
          %644 = vmatprep.subr.mxu0 0.0
          %645 = vmatpush1.msra.mxu0 0.0
          %646 = vmatprep.subr.mxu0 0.0
          %647 = vmatpush1.msra.mxu0 0.0
          %648 = vmatprep.subr.mxu0 0.0
          %649 = vmatpush1.msra.mxu0 0.0
          %650 = vmatprep.subr.mxu0 0.0
          %651 = vmatpush1.msra.mxu0 0.0
          %652 = vmatprep.subr.mxu0 0.0
          %653 = vmatpush1.msra.mxu0 0.0
          %654 = vmatprep.subr.mxu0 0.0
          %655 = vmatpush1.msra.mxu0 0.0
          %656 = vmatprep.subr.mxu0 0.0
          %657 = vmatpush1.msra.mxu0 0.0
          %658 = vmatprep.subr.mxu0 0.0
          %659 = vmatpush1.msra.mxu0 0.0
          %660 = vmatprep.subr.mxu0 0.0
          %661 = vmatpush1.msra.mxu0 0.0
          %662 = vmatprep.subr.mxu0 0.0
          %663 = vmatpush1.msra.mxu0 0.0
          %664 = vmatprep.subr.mxu0 0.0
          %665 = vmatpush1.msra.mxu0 0.0
          %666 = vmatprep.mubr.f32.mxu0 0.0
          %667 = vmatmul.mubr.f32.gmra.mrb[0].mxu0 %v600
          %v668 = vpop.f32.mrb[0].mxu0
          %v669 = vadd.f32 0.0, %v668
          %v670 = vpop.f32.mrb[0].mxu0
          %671 = vdwg.mxu0
          %v672 = vld [vmem:[#allocation2] sm:$0xf]
          %v673 = vadd.f32 %v672, %v669
          %674 = vst [vmem:[#allocation2] sm:$0xf] %v673
          %v675 = vld [vmem:[#allocation2] sm:$0xff]
          %v677 = vcombine.high %v669, %v669
          %678 = vrot.lane.b32.xlu0 %v677, 1
          %v679 = vpop.permute.xlu0 %678
          %v680 = vrot.slane %v679, 4
          %vm681 = vcmask 7168
          %v682 = vsel %vm681, %v680, %v679
          %v684 = vadd.f32 %v675, %v682
          %vm685 = vcmask 1043464
          %vm686 = vmor %vm555, %vm685
          %687 = vst.msk [vmem:[#allocation2] sm:$0xff] %vm686, %v684
        $region72: #{tpu_custom_call.1} parent=55 // pred_fallthru
          _
        %p688 = scmp.gt.s32.totalorder %s43, 0
        // Predicated region
        $region73: #{tpu_custom_call.1} parent=55 // pred_check
          %p689 = pneg %p688
        $region74: #{tpu_custom_call.1} parent=55 // pred_check_branch
          %691 = sbr.rel (%p689) target = $region76
        $region75: #{tpu_custom_call.1} parent=55 // pred_region
          %v692 = vld [vmem:[#allocation2] sm:$0xf]
          %v693 = vld [vmem:[#allocation5] sm:$0xf]
          %v694 = vadd.f32 %v692, %v693
          %vm695 = vcmask 3072
          %696 = vst.msk [vmem:[#allocation2] sm:$0xf] %vm695, %v694
        $region76: #{tpu_custom_call.1} parent=55 // pred_fallthru
          _
        %v697 = vld [vmem:[#allocation2 + $0x4] sm:$0xf]
        %vm698 = vcmask 3072
        %699 = vst.msk [vmem:[#allocation5] sm:$0xf] %vm698, %v697
        %v700 = vld [vmem:[#allocation2] sm:$0xf]
        %s701 = sld [smem:[#allocation8]]
        %v702 = vstv %s701
        %v703 = vadd.f32 %v700, %v702
        %704 = vst [vmem:[%s533] sm:$0xf] %v703
        %vm705 = vcmask 23556
        %vm706 = vmor %vm705, %vm554
        %707 = vst.msk [vmem:[#allocation3] sm:$0xff] %vm706, 0.0
        // Predicated region
        $region77: #{tpu_custom_call.1} parent=55 // pred_check
          %p708 = pneg %p558
        $region78: #{tpu_custom_call.1} parent=55 // pred_check_branch
          %710 = sbr.rel (%p708) target = $region80
        $region79: #{tpu_custom_call.1} parent=55 // pred_region
          %v711 = vld [vmem:[%s480] sm:$0xff]
          %v712 = vld [vmem:[%s480 + $0x8] sm:$0xff]
          %v713 = vld [vmem:[%s4] sm:$0xff]
          %v714 = vld [vmem:[%s4 + $0x8] sm:$0xff]
          %715 = vxpose.xlu0.b32.start [1/16] %v713, 128
          %716 = vxpose.xlu0.b32.cont [2/16] %v714, 128
          %717 = vxpose.xlu0.b32.cont [3/16] 0.0, 128
          %718 = vxpose.xlu0.b32.cont [4/16] 0.0, 128
          %719 = vxpose.xlu0.b32.cont [5/16] 0.0, 128
          %720 = vxpose.xlu0.b32.cont [6/16] 0.0, 128
          %721 = vxpose.xlu0.b32.cont [7/16] 0.0, 128
          %722 = vxpose.xlu0.b32.cont [8/16] 0.0, 128
          %723 = vxpose.xlu0.b32.cont [9/16] 0.0, 128
          %724 = vxpose.xlu0.b32.cont [10/16] 0.0, 128
          %725 = vxpose.xlu0.b32.cont [11/16] 0.0, 128
          %726 = vxpose.xlu0.b32.cont [12/16] 0.0, 128
          %727 = vxpose.xlu0.b32.cont [13/16] 0.0, 128
          %728 = vxpose.xlu0.b32.cont [14/16] 0.0, 128
          %729 = vxpose.xlu0.b32.cont [15/16] 0.0, 128
          %730 = vxpose.xlu0.b32.end [16/16] 0.0, 128
          %v731 = vpop.trf.xlu0
          %v732 = vpop.trf.xlu0
          %v733 = vpop.trf.xlu0
          %v734 = vpop.trf.xlu0
          %v735 = vpop.trf.xlu0
          %v736 = vpop.trf.xlu0
          %v737 = vpop.trf.xlu0
          %v738 = vpop.trf.xlu0
          %v739 = vpop.trf.xlu0
          %v740 = vpop.trf.xlu0
          %v741 = vpop.trf.xlu0
          %v742 = vpop.trf.xlu0
          %v743 = vpop.trf.xlu0
          %v744 = vpop.trf.xlu0
          %v745 = vpop.trf.xlu0
          %v746 = vpop.trf.xlu0
          %vm747 = vcmask 130048
          %v749 = vsel %vm747, %v731, 0
          %v752 = vsel %vm747, %v732, 0
          %754 = vmatprep.subr.mxu0 0.0
          %755 = vmatpush1.msra.mxu0 %v711
          %756 = vmatprep.subr.mxu0 0.0
          %757 = vmatpush1.msra.mxu0 %v712
          %758 = vmatprep.subr.mxu0 0.0
          %759 = vmatpush1.msra.mxu0 0.0
          %760 = vmatprep.subr.mxu0 0.0
          %761 = vmatpush1.msra.mxu0 0.0
          %762 = vmatprep.subr.mxu0 0.0
          %763 = vmatpush1.msra.mxu0 0.0
          %764 = vmatprep.subr.mxu0 0.0
          %765 = vmatpush1.msra.mxu0 0.0
          %766 = vmatprep.subr.mxu0 0.0
          %767 = vmatpush1.msra.mxu0 0.0
          %768 = vmatprep.subr.mxu0 0.0
          %769 = vmatpush1.msra.mxu0 0.0
          %770 = vmatprep.subr.mxu0 0.0
          %771 = vmatpush1.msra.mxu0 0.0
          %772 = vmatprep.subr.mxu0 0.0
          %773 = vmatpush1.msra.mxu0 0.0
          %774 = vmatprep.subr.mxu0 0.0
          %775 = vmatpush1.msra.mxu0 0.0
          %776 = vmatprep.subr.mxu0 0.0
          %777 = vmatpush1.msra.mxu0 0.0
          %778 = vmatprep.subr.mxu0 0.0
          %779 = vmatpush1.msra.mxu0 0.0
          %780 = vmatprep.subr.mxu0 0.0
          %781 = vmatpush1.msra.mxu0 0.0
          %782 = vmatprep.subr.mxu0 0.0
          %783 = vmatpush1.msra.mxu0 0.0
          %784 = vmatprep.subr.mxu0 0.0
          %785 = vmatpush1.msra.mxu0 0.0
          %786 = vmatprep.subr.mxu0 0.0
          %787 = vmatpush1.msra.mxu0 0.0
          %788 = vmatprep.subr.mxu0 0.0
          %789 = vmatpush1.msra.mxu0 0.0
          %790 = vmatprep.subr.mxu0 0.0
          %791 = vmatpush1.msra.mxu0 0.0
          %792 = vmatprep.subr.mxu0 0.0
          %793 = vmatpush1.msra.mxu0 0.0
          %794 = vmatprep.subr.mxu0 0.0
          %795 = vmatpush1.msra.mxu0 0.0
          %796 = vmatprep.subr.mxu0 0.0
          %797 = vmatpush1.msra.mxu0 0.0
          %798 = vmatprep.subr.mxu0 0.0
          %799 = vmatpush1.msra.mxu0 0.0
          %800 = vmatprep.subr.mxu0 0.0
          %801 = vmatpush1.msra.mxu0 0.0
          %802 = vmatprep.subr.mxu0 0.0
          %803 = vmatpush1.msra.mxu0 0.0
          %804 = vmatprep.subr.mxu0 0.0
          %805 = vmatpush1.msra.mxu0 0.0
          %806 = vmatprep.subr.mxu0 0.0
          %807 = vmatpush1.msra.mxu0 0.0
          %808 = vmatprep.subr.mxu0 0.0
          %809 = vmatpush1.msra.mxu0 0.0
          %810 = vmatprep.subr.mxu0 0.0
          %811 = vmatpush1.msra.mxu0 0.0
          %812 = vmatprep.subr.mxu0 0.0
          %813 = vmatpush1.msra.mxu0 0.0
          %814 = vmatprep.subr.mxu0 0.0
          %815 = vmatpush1.msra.mxu0 0.0
          %816 = vmatprep.subr.mxu0 0.0
          %817 = vmatpush1.msra.mxu0 0.0
          %818 = vmatprep.mubr.f32.mxu0 0.0
          %819 = vmatmul.mubr.f32.gmra.mrb[0].mxu0 %v749
          %v820 = vpop.f32.mrb[0].mxu0
          %v821 = vadd.f32 0.0, %v820
          %v822 = vpop.f32.mrb[0].mxu0
          %823 = vmatprep.mubr.f32.mxu0 0.0
          %824 = vmatmul.mubr.f32.gmra.mrb[0].mxu0 %v752
          %v825 = vpop.f32.mrb[0].mxu0
          %v826 = vadd.f32 0.0, %v825
          %v827 = vpop.f32.mrb[0].mxu0
          %828 = vdwg.mxu0
          %v829 = vld [vmem:[#allocation3] sm:$0xf]
          %v830 = vadd.f32 %v829, %v821
          %831 = vst [vmem:[#allocation3] sm:$0xf] %v830
          %v832 = vld [vmem:[#allocation3] sm:$0xff]
          %v834 = vcombine.high %v821, %v821
          %835 = vrot.lane.b32.xlu0 %v834, 1
          %v836 = vpop.permute.xlu0 %835
          %v837 = vrot.slane %v836, 4
          %vm838 = vcmask 7168
          %v839 = vsel %vm838, %v837, %v836
          %v841 = vadd.f32 %v832, %v839
          %vm842 = vcmask 1043464
          %vm843 = vmor %vm555, %vm842
          %844 = vst.msk [vmem:[#allocation3] sm:$0xff] %vm843, %v841
          %v845 = vld [vmem:[#allocation3] sm:$0xff]
          %847 = vrot.lane.b32.xlu0 %v826, 2
          %v848 = vpop.permute.xlu0 %847
          %v849 = vrot.slane %v848, 4
          %vm850 = vcmask 15360
          %v851 = vsel %vm850, %v849, %v848
          %v853 = vadd.f32 %v845, %v851
          %vm854 = vcmask 1043472
          %vm855 = vcmask 15364
          %vm856 = vmor %vm855, %vm854
          %857 = vst.msk [vmem:[#allocation3] sm:$0xff] %vm856, %v853
          %v858 = vld [vmem:[#allocation3] sm:$0xff]
          %v859 = vcombine.high %v826, %v826
          %860 = vrot.lane.b32.xlu0 %v859, 3
          %v861 = vpop.permute.xlu0 %860
          %v862 = vrot.slane %v861, 4
          %vm863 = vcmask 23552
          %v864 = vsel %vm863, %v862, %v861
          %v866 = vadd.f32 %v858, %v864
          %vm867 = vcmask 1043480
          %vm868 = vmor %vm705, %vm867
          %869 = vst.msk [vmem:[#allocation3] sm:$0xff] %vm868, %v866
        $region80: #{tpu_custom_call.1} parent=55 // pred_fallthru
          _
        // Predicated region
        $region81: #{tpu_custom_call.1} parent=55 // pred_check
          %p870 = pneg %p688
        $region82: #{tpu_custom_call.1} parent=55 // pred_check_branch
          %872 = sbr.rel (%p870) target = $region84
        $region83: #{tpu_custom_call.1} parent=55 // pred_region
          %v873 = vld [vmem:[#allocation3] sm:$0xf]
          %v874 = vld [vmem:[#allocation6] sm:$0xf]
          %v875 = vadd.f32 %v873, %v874
          %vm876 = vcmask 19456
          %877 = vst.msk [vmem:[#allocation3] sm:$0xf] %vm876, %v875
        $region84: #{tpu_custom_call.1} parent=55 // pred_fallthru
          _
        %v878 = vld [vmem:[#allocation3 + $0x4] sm:$0xf]
        %vm879 = vcmask 19456
        %880 = vst.msk [vmem:[#allocation6] sm:$0xf] %vm879, %v878
        %v881 = vld [vmem:[#allocation3] sm:$0xf]
        %s882 = sld [smem:[#allocation9]]
        %v883 = vstv %s882
        %v884 = vadd.f32 %v881, %v883
        %885 = vst [vmem:[%s540] sm:$0xf] %v884
        %vm886 = vcmask 56324
        %vm887 = vmor %vm886, %vm554
        %888 = vst.msk [vmem:[#allocation4] sm:$0xff] %vm887, 0.0
        // Predicated region
        $region85: #{tpu_custom_call.1} parent=55 // pred_check
          %p889 = pneg %p558
        $region86: #{tpu_custom_call.1} parent=55 // pred_check_branch
          %891 = sbr.rel (%p889) target = $region88
        $region87: #{tpu_custom_call.1} parent=55 // pred_region
          %v892 = vld [vmem:[%s489] sm:$0xff]
          %v893 = vld [vmem:[%s489 + $0x8] sm:$0xff]
          %v894 = vld [vmem:[%s5] sm:$0xff]
          %v895 = vld [vmem:[%s5 + $0x8] sm:$0xff]
          %896 = vxpose.xlu0.b32.start [1/16] %v894, 128
          %897 = vxpose.xlu0.b32.cont [2/16] %v895, 128
          %898 = vxpose.xlu0.b32.cont [3/16] 0.0, 128
          %899 = vxpose.xlu0.b32.cont [4/16] 0.0, 128
          %900 = vxpose.xlu0.b32.cont [5/16] 0.0, 128
          %901 = vxpose.xlu0.b32.cont [6/16] 0.0, 128
          %902 = vxpose.xlu0.b32.cont [7/16] 0.0, 128
          %903 = vxpose.xlu0.b32.cont [8/16] 0.0, 128
          %904 = vxpose.xlu0.b32.cont [9/16] 0.0, 128
          %905 = vxpose.xlu0.b32.cont [10/16] 0.0, 128
          %906 = vxpose.xlu0.b32.cont [11/16] 0.0, 128
          %907 = vxpose.xlu0.b32.cont [12/16] 0.0, 128
          %908 = vxpose.xlu0.b32.cont [13/16] 0.0, 128
          %909 = vxpose.xlu0.b32.cont [14/16] 0.0, 128
          %910 = vxpose.xlu0.b32.cont [15/16] 0.0, 128
          %911 = vxpose.xlu0.b32.end [16/16] 0.0, 128
          %v912 = vpop.trf.xlu0
          %v913 = vpop.trf.xlu0
          %v914 = vpop.trf.xlu0
          %v915 = vpop.trf.xlu0
          %v916 = vpop.trf.xlu0
          %v917 = vpop.trf.xlu0
          %v918 = vpop.trf.xlu0
          %v919 = vpop.trf.xlu0
          %v920 = vpop.trf.xlu0
          %v921 = vpop.trf.xlu0
          %v922 = vpop.trf.xlu0
          %v923 = vpop.trf.xlu0
          %v924 = vpop.trf.xlu0
          %v925 = vpop.trf.xlu0
          %v926 = vpop.trf.xlu0
          %v927 = vpop.trf.xlu0
          %vm928 = vcmask 130048
          %v930 = vsel %vm928, %v912, 0
          %v933 = vsel %vm928, %v913, 0
          %v936 = vsel %vm928, %v914, 0
          %v939 = vsel %vm928, %v915, 0
          %941 = vmatprep.subr.mxu0 0.0
          %942 = vmatpush1.msra.mxu0 %v892
          %943 = vmatprep.subr.mxu0 0.0
          %944 = vmatpush1.msra.mxu0 %v893
          %945 = vmatprep.subr.mxu0 0.0
          %946 = vmatpush1.msra.mxu0 0.0
          %947 = vmatprep.subr.mxu0 0.0
          %948 = vmatpush1.msra.mxu0 0.0
          %949 = vmatprep.subr.mxu0 0.0
          %950 = vmatpush1.msra.mxu0 0.0
          %951 = vmatprep.subr.mxu0 0.0
          %952 = vmatpush1.msra.mxu0 0.0
          %953 = vmatprep.subr.mxu0 0.0
          %954 = vmatpush1.msra.mxu0 0.0
          %955 = vmatprep.subr.mxu0 0.0
          %956 = vmatpush1.msra.mxu0 0.0
          %957 = vmatprep.subr.mxu0 0.0
          %958 = vmatpush1.msra.mxu0 0.0
          %959 = vmatprep.subr.mxu0 0.0
          %960 = vmatpush1.msra.mxu0 0.0
          %961 = vmatprep.subr.mxu0 0.0
          %962 = vmatpush1.msra.mxu0 0.0
          %963 = vmatprep.subr.mxu0 0.0
          %964 = vmatpush1.msra.mxu0 0.0
          %965 = vmatprep.subr.mxu0 0.0
          %966 = vmatpush1.msra.mxu0 0.0
          %967 = vmatprep.subr.mxu0 0.0
          %968 = vmatpush1.msra.mxu0 0.0
          %969 = vmatprep.subr.mxu0 0.0
          %970 = vmatpush1.msra.mxu0 0.0
          %971 = vmatprep.subr.mxu0 0.0
          %972 = vmatpush1.msra.mxu0 0.0
          %973 = vmatprep.subr.mxu0 0.0
          %974 = vmatpush1.msra.mxu0 0.0
          %975 = vmatprep.subr.mxu0 0.0
          %976 = vmatpush1.msra.mxu0 0.0
          %977 = vmatprep.subr.mxu0 0.0
          %978 = vmatpush1.msra.mxu0 0.0
          %979 = vmatprep.subr.mxu0 0.0
          %980 = vmatpush1.msra.mxu0 0.0
          %981 = vmatprep.subr.mxu0 0.0
          %982 = vmatpush1.msra.mxu0 0.0
          %983 = vmatprep.subr.mxu0 0.0
          %984 = vmatpush1.msra.mxu0 0.0
          %985 = vmatprep.subr.mxu0 0.0
          %986 = vmatpush1.msra.mxu0 0.0
          %987 = vmatprep.subr.mxu0 0.0
          %988 = vmatpush1.msra.mxu0 0.0
          %989 = vmatprep.subr.mxu0 0.0
          %990 = vmatpush1.msra.mxu0 0.0
          %991 = vmatprep.subr.mxu0 0.0
          %992 = vmatpush1.msra.mxu0 0.0
          %993 = vmatprep.subr.mxu0 0.0
          %994 = vmatpush1.msra.mxu0 0.0
          %995 = vmatprep.subr.mxu0 0.0
          %996 = vmatpush1.msra.mxu0 0.0
          %997 = vmatprep.subr.mxu0 0.0
          %998 = vmatpush1.msra.mxu0 0.0
          %999 = vmatprep.subr.mxu0 0.0
          %1000 = vmatpush1.msra.mxu0 0.0
          %1001 = vmatprep.subr.mxu0 0.0
          %1002 = vmatpush1.msra.mxu0 0.0
          %1003 = vmatprep.subr.mxu0 0.0
          %1004 = vmatpush1.msra.mxu0 0.0
          %1005 = vmatprep.mubr.f32.mxu0 0.0
          %1006 = vmatmul.mubr.f32.gmra.mrb[0].mxu0 %v930
          %v1007 = vpop.f32.mrb[0].mxu0
          %v1008 = vadd.f32 0.0, %v1007
          %v1009 = vpop.f32.mrb[0].mxu0
          %1010 = vmatprep.mubr.f32.mxu0 0.0
          %1011 = vmatmul.mubr.f32.gmra.mrb[0].mxu0 %v933
          %v1012 = vpop.f32.mrb[0].mxu0
          %v1013 = vadd.f32 0.0, %v1012
          %v1014 = vpop.f32.mrb[0].mxu0
          %1015 = vmatprep.mubr.f32.mxu0 0.0
          %1016 = vmatmul.mubr.f32.gmra.mrb[0].mxu0 %v936
          %v1017 = vpop.f32.mrb[0].mxu0
          %v1018 = vadd.f32 0.0, %v1017
          %v1019 = vpop.f32.mrb[0].mxu0
          %1020 = vmatprep.mubr.f32.mxu0 0.0
          %1021 = vmatmul.mubr.f32.gmra.mrb[0].mxu0 %v939
          %v1022 = vpop.f32.mrb[0].mxu0
          %v1023 = vadd.f32 0.0, %v1022
          %v1024 = vpop.f32.mrb[0].mxu0
          %1025 = vdwg.mxu0
          %v1026 = vld [vmem:[#allocation4] sm:$0xf]
          %v1027 = vadd.f32 %v1026, %v1008
          %1028 = vst [vmem:[#allocation4] sm:$0xf] %v1027
          %v1029 = vld [vmem:[#allocation4] sm:$0xff]
          %v1031 = vcombine.high %v1008, %v1008
          %1032 = vrot.lane.b32.xlu0 %v1031, 1
          %v1033 = vpop.permute.xlu0 %1032
          %v1034 = vrot.slane %v1033, 4
          %vm1035 = vcmask 7168
          %v1036 = vsel %vm1035, %v1034, %v1033
          %v1038 = vadd.f32 %v1029, %v1036
          %vm1039 = vcmask 1043464
          %vm1040 = vmor %vm555, %vm1039
          %1041 = vst.msk [vmem:[#allocation4] sm:$0xff] %vm1040, %v1038
          %v1042 = vld [vmem:[#allocation4] sm:$0xff]
          %1044 = vrot.lane.b32.xlu0 %v1013, 2
          %v1045 = vpop.permute.xlu0 %1044
          %v1046 = vrot.slane %v1045, 4
          %vm1047 = vcmask 15360
          %v1048 = vsel %vm1047, %v1046, %v1045
          %v1050 = vadd.f32 %v1042, %v1048
          %vm1051 = vcmask 1043472
          %vm1052 = vcmask 15364
          %vm1053 = vmor %vm1052, %vm1051
          %1054 = vst.msk [vmem:[#allocation4] sm:$0xff] %vm1053, %v1050
          %v1055 = vld [vmem:[#allocation4] sm:$0xff]
          %v1056 = vcombine.high %v1013, %v1013
          %1057 = vrot.lane.b32.xlu0 %v1056, 3
          %v1058 = vpop.permute.xlu0 %1057
          %v1059 = vrot.slane %v1058, 4
          %vm1060 = vcmask 23552
          %v1061 = vsel %vm1060, %v1059, %v1058
          %v1063 = vadd.f32 %v1055, %v1061
          %vm1064 = vcmask 1043480
          %vm1065 = vmor %vm705, %vm1064
          %1066 = vst.msk [vmem:[#allocation4] sm:$0xff] %vm1065, %v1063
          %v1067 = vld [vmem:[#allocation4] sm:$0xff]
          %1069 = vrot.lane.b32.xlu0 %v1018, 4
          %v1070 = vpop.permute.xlu0 %1069
          %v1071 = vrot.slane %v1070, 4
          %vm1072 = vcmask 31744
          %v1073 = vsel %vm1072, %v1071, %v1070
          %v1075 = vadd.f32 %v1067, %v1073
          %vm1076 = vcmask 1043488
          %vm1077 = vcmask 31748
          %vm1078 = vmor %vm1077, %vm1076
          %1079 = vst.msk [vmem:[#allocation4] sm:$0xff] %vm1078, %v1075
          %v1080 = vld [vmem:[#allocation4] sm:$0xff]
          %v1081 = vcombine.high %v1018, %v1018
          %1082 = vrot.lane.b32.xlu0 %v1081, 5
          %v1083 = vpop.permute.xlu0 %1082
          %v1084 = vrot.slane %v1083, 4
          %vm1085 = vcmask 39936
          %v1086 = vsel %vm1085, %v1084, %v1083
          %v1088 = vadd.f32 %v1080, %v1086
          %vm1089 = vcmask 1043496
          %vm1090 = vcmask 39940
          %vm1091 = vmor %vm1090, %vm1089
          %1092 = vst.msk [vmem:[#allocation4] sm:$0xff] %vm1091, %v1088
          %v1093 = vld [vmem:[#allocation4] sm:$0xff]
          %1095 = vrot.lane.b32.xlu0 %v1023, 6
          %v1096 = vpop.permute.xlu0 %1095
          %v1097 = vrot.slane %v1096, 4
          %vm1098 = vcmask 48128
          %v1099 = vsel %vm1098, %v1097, %v1096
          %v1101 = vadd.f32 %v1093, %v1099
          %vm1102 = vcmask 1043504
          %vm1103 = vcmask 48132
          %vm1104 = vmor %vm1103, %vm1102
          %1105 = vst.msk [vmem:[#allocation4] sm:$0xff] %vm1104, %v1101
          %v1106 = vld [vmem:[#allocation4] sm:$0xff]
          %v1107 = vcombine.high %v1023, %v1023
          %1108 = vrot.lane.b32.xlu0 %v1107, 7
          %v1109 = vpop.permute.xlu0 %1108
          %v1110 = vrot.slane %v1109, 4
          %vm1111 = vcmask 56320
          %v1112 = vsel %vm1111, %v1110, %v1109
          %v1114 = vadd.f32 %v1106, %v1112
          %vm1115 = vcmask 1043512
          %vm1116 = vmor %vm886, %vm1115
          %1117 = vst.msk [vmem:[#allocation4] sm:$0xff] %vm1116, %v1114
        $region88: #{tpu_custom_call.1} parent=55 // pred_fallthru
          _
        // Predicated region
        $region89: #{tpu_custom_call.1} parent=55 // pred_check
          %p1118 = pneg %p688
        $region90: #{tpu_custom_call.1} parent=55 // pred_check_branch
          %1120 = sbr.rel (%p1118) target = $region92
        $region91: #{tpu_custom_call.1} parent=55 // pred_region
          %v1121 = vld [vmem:[#allocation4] sm:$0xf]
          %v1122 = vld [vmem:[#allocation7] sm:$0xf]
          %v1123 = vadd.f32 %v1121, %v1122
          %vm1124 = vcmask 52224
          %1125 = vst.msk [vmem:[#allocation4] sm:$0xf] %vm1124, %v1123
        $region92: #{tpu_custom_call.1} parent=55 // pred_fallthru
          _
        %v1126 = vld [vmem:[#allocation4 + $0x4] sm:$0xf]
        %vm1127 = vcmask 52224
        %1128 = vst.msk [vmem:[#allocation7] sm:$0xf] %vm1127, %v1126
        %v1129 = vld [vmem:[#allocation4] sm:$0xf]
        %s1130 = sld [smem:[#allocation10]]
        %v1131 = vstv %s1130
        %v1132 = vadd.f32 %v1129, %v1131
        %1133 = vst [vmem:[%s547] sm:$0xf] %v1132
        %s1134 = sand.u32 %s282, 1
        %s1135 = scalar_lea.sflag [#allocation13], %s1134
        %s1136 = sand.u32 %s282, 1
        %s1137 = smul.addr %s1136, 4
        %s1138 = scalar_lea.vmem [#allocation17], %s1137
        %s1139 = sand.u32 %s38, 1
        %s1140 = scalar_lea.sflag [#allocation19], %s1139
        %s1141 = sand.u32 %s310, 1
        %s1142 = smul.addr %s1141, 4
        %s1143 = scalar_lea.vmem [#allocation18], %s1142
        %s1144 = sand.u32 %s38, 1
        %s1145 = scalar_lea.sflag [#allocation19], %s1144
        %s1146 = sand.u32 %s338, 1
        %s1147 = smul.addr %s1146, 4
        %s1148 = scalar_lea.vmem [#allocation20], %s1147
        // Predicated region
        $region93: #{tpu_custom_call.1} parent=55 // pred_check
          %p1149 = pneg %p292
        $region94: #{tpu_custom_call.1} parent=55 // pred_check_branch
          %1151 = sbr.rel (%p1149) target = $region96
        $region95: #{tpu_custom_call.1} parent=55 // pred_region
          %s1153 = ssub.s32 64, 64
          %1154 = vsyncadd %s1135, %s1153
          %s1155 = smul.addr %s42, 4
          %s1156 = sadd.s32 %s43, %s1155
          %s1157 = smul.addr %s1156, 64
          %s1158 = scalar_lea.hbm %s9, %s1157
          %s1160 = sshll.u32 %s1138, 4
          %s1161 = int_to_ptr.vmem [resolvable:$true] %s1160
          %1163 = dma.vmem_to_hbm [thread:$0]  %s1161, 64, %s1158, %s1135
        $region96: #{tpu_custom_call.1} parent=55 // pred_fallthru
          _
        // Predicated region
        $region97: #{tpu_custom_call.1} parent=55 // pred_check
          %p1164 = pneg %p320
        $region98: #{tpu_custom_call.1} parent=55 // pred_check_branch
          %1166 = sbr.rel (%p1164) target = $region100
        $region99: #{tpu_custom_call.1} parent=55 // pred_region
          %s1168 = ssub.s32 64, 64
          %1169 = vsyncadd %s1140, %s1168
          %s1170 = smul.addr %s42, 4
          %s1171 = sadd.s32 %s43, %s1170
          %s1172 = smul.addr %s1171, 64
          %s1173 = scalar_lea.hbm %s10, %s1172
          %s1175 = sshll.u32 %s1143, 4
          %s1176 = int_to_ptr.vmem [resolvable:$true] %s1175
          %1178 = dma.vmem_to_hbm [thread:$0]  %s1176, 64, %s1173, %s1140
        $region100: #{tpu_custom_call.1} parent=55 // pred_fallthru
          _
        // Predicated region
        $region101: #{tpu_custom_call.1} parent=55 // pred_check
          %p1179 = pneg %p348
        $region102: #{tpu_custom_call.1} parent=55 // pred_check_branch
          %1181 = sbr.rel (%p1179) target = $region104
        $region103: #{tpu_custom_call.1} parent=55 // pred_region
          %s1183 = ssub.s32 64, 64
          %1184 = vsyncadd %s1145, %s1183
          %s1185 = smul.addr %s42, 4
          %s1186 = sadd.s32 %s43, %s1185
          %s1187 = smul.addr %s1186, 64
          %s1188 = scalar_lea.hbm %s11, %s1187
          %s1190 = sshll.u32 %s1148, 4
          %s1191 = int_to_ptr.vmem [resolvable:$true] %s1190
          %1193 = dma.vmem_to_hbm [thread:$0]  %s1191, 64, %s1188, %s1145
        $region104: #{tpu_custom_call.1} parent=55 // pred_fallthru
          _
      $region56: #{tpu_custom_call.1} parent=5 // pred_fallthru
        _
      %p1194 = scmp.le.s32.totalorder 2, %s33
      // Predicated region
      $region105: #{tpu_custom_call.1} parent=5 // pred_check
        %p1195 = pneg %p1194
      $region106: #{tpu_custom_call.1} parent=5 // pred_check_branch
        %1197 = sbr.rel (%p1195) target = $region108
      $region107: #{tpu_custom_call.1} parent=5 // pred_region
        %s1198 = ssub.s32 %s33, 2
        // Predicated region
        $region109: #{tpu_custom_call.1} parent=107 // pred_check
          %p1199 = pneg %p298
        $region110: #{tpu_custom_call.1} parent=107 // pred_check_branch
          %1201 = sbr.rel (%p1199) target = $region112
        $region111: #{tpu_custom_call.1} parent=107 // pred_region
          %s1202 = sand.u32 %s283, 1
          %s1203 = scalar_lea.sflag [#allocation13], %s1202
          %s1204 = sand.u32 %s283, 1
          %s1205 = smul.addr %s1204, 4
          %s1206 = scalar_lea.vmem [#allocation17], %s1205
          %1207 = dma.done %s1203, 64
        $region112: #{tpu_custom_call.1} parent=107 // pred_fallthru
          _
        // Predicated region
        $region113: #{tpu_custom_call.1} parent=107 // pred_check
          %p1208 = pneg %p326
        $region114: #{tpu_custom_call.1} parent=107 // pred_check_branch
          %1210 = sbr.rel (%p1208) target = $region116
        $region115: #{tpu_custom_call.1} parent=107 // pred_region
          %s1211 = sand.u32 %s39, 1
          %s1212 = scalar_lea.sflag [#allocation19], %s1211
          %s1213 = sand.u32 %s311, 1
          %s1214 = smul.addr %s1213, 4
          %s1215 = scalar_lea.vmem [#allocation18], %s1214
          %1216 = dma.done %s1212, 64
        $region116: #{tpu_custom_call.1} parent=107 // pred_fallthru
          _
        // Predicated region
        $region117: #{tpu_custom_call.1} parent=107 // pred_check
          %p1217 = pneg %p354
        $region118: #{tpu_custom_call.1} parent=107 // pred_check_branch
          %1219 = sbr.rel (%p1217) target = $region120
        $region119: #{tpu_custom_call.1} parent=107 // pred_region
          %s1220 = sand.u32 %s39, 1
          %s1221 = scalar_lea.sflag [#allocation19], %s1220
          %s1222 = sand.u32 %s339, 1
          %s1223 = smul.addr %s1222, 4
          %s1224 = scalar_lea.vmem [#allocation20], %s1223
          %1225 = dma.done %s1221, 64
        $region120: #{tpu_custom_call.1} parent=107 // pred_fallthru
          _
      $region108: #{tpu_custom_call.1} parent=5 // pred_fallthru
        _
    $region6: #{tpu_custom_call.1} parent=1 // loop_footer
      %s37 = sadd.s32 1, %s33
    $region7: #{tpu_custom_call.1} parent=1 // loop_footer_branch
      %32 = sbr.rel target = $region3
    $region8: #{tpu_custom_call.1} parent=1 // loop_exit
      _
    %1226 = vsyncpa [#allocation12], 1
    %s1227 = scalar_lea.sflag [#allocation12], 1
    %1228 = vsyncpa %s1227, 1
    %1229 = vsyncpa [#allocation15], 1
    %s1230 = scalar_lea.sflag [#allocation15], 1
    %1231 = vsyncpa %s1230, 1
    %1232 = vsyncpa [#allocation13], 1
    %s1233 = scalar_lea.sflag [#allocation13], 1
    %1234 = vsyncpa %s1233, 1
    %1235 = vsyncpa [#allocation19], 1
    %s1236 = scalar_lea.sflag [#allocation19], 1
    %1237 = vsyncpa %s1236, 1

</llo_original>
